<compile_context>
chip_gen: v7x
topology: tpu7x:2x2x1
jax: 0.10.0
libtpu: 0.0.40
codegen_flags: <defaults>
</compile_context>

<pallas_src>
import functools

import jax
import jax.numpy as jnp
from jax.experimental import pallas as pl
from jax.experimental.pallas import tpu as pltpu

# ---------------------------------------------------------------------------
# Problem sizes
# ---------------------------------------------------------------------------
B = 256          # batch (amortizes weight DMA; multiple of TM)
TM = 128         # batch rows per grid step (full MXU row utilization)
LATENT = 128     # latent dim of z
HIDDEN = 128     # decoder hidden width
C, H, W = 4, 16, 16
OUT = C * H * W  # 1024 flattened image


# ---------------------------------------------------------------------------
# Kernels
# ---------------------------------------------------------------------------
def _decode_body(z_ref, w1_ref, b1_ref, w2_ref, b2_ref):
    """Fused decoder math for one batch tile: returns x_new as (TM, OUT) f32.

    Matmul operands are bf16 (halved weight DMA, native MXU rate on v6e/v7x);
    accumulation and all elementwise math (bias, ReLU, sigmoid) stay f32.
    """
    z = z_ref[...].astype(jnp.bfloat16)                        # (TM, LATENT) bf16
    h = jnp.dot(z, w1_ref[...], preferred_element_type=jnp.float32) + b1_ref[...]
    h = jnp.maximum(h, 0.0)                                    # ReLU (f32, VPU)
    o = jnp.dot(h.astype(jnp.bfloat16), w2_ref[...],
                preferred_element_type=jnp.float32) + b2_ref[...]
    return jax.nn.sigmoid(o)                                   # Sigmoid (f32)


def decode_kernel(z_ref, w1_ref, b1_ref, w2_ref, b2_ref, out_ref):
    out_ref[...] = _decode_body(z_ref, w1_ref, b1_ref, w2_ref, b2_ref)


def loss_kernel(z_ref, x_ref, w1_ref, b1_ref, w2_ref, b2_ref,
                loss_ref, acc_ref, *, inv_n):
    """Fused decode + MSE(mean) over the whole batch, accumulated across tiles."""
    i = pl.program_id(0)

    @pl.when(i == 0)
    def _():
        acc_ref[0] = jnp.float32(0.0)

    x_new = _decode_body(z_ref, w1_ref, b1_ref, w2_ref, b2_ref)
    diff = x_new - x_ref[...]                                  # (TM, OUT) f32
    sq = diff * diff
    # Sublane-first reduction (VPU), then lane reduction (XLU).
    col = jnp.sum(sq, axis=0, keepdims=True)                   # (1, OUT)
    partial = jnp.sum(col)                                     # scalar
    acc_ref[0] = acc_ref[0] + partial

    @pl.when(i == pl.num_programs(0) - 1)
    def _():
        # F.mse_loss default reduction='mean'
        loss_ref[0, 0] = acc_ref[0] * jnp.float32(inv_n)


# ---------------------------------------------------------------------------
# pallas_call builders
# ---------------------------------------------------------------------------
_WEIGHT_BYTES = 2 * (LATENT * HIDDEN + HIDDEN * OUT) + 4 * (HIDDEN + OUT)


def _decode_call(batch):
    assert batch % TM == 0, "batch must be a multiple of TM"
    flops = 2 * batch * (LATENT * HIDDEN + HIDDEN * OUT)
    bytes_accessed = _WEIGHT_BYTES + 4 * batch * LATENT + 4 * batch * OUT
    return pl.pallas_call(
        decode_kernel,
        out_shape=jax.ShapeDtypeStruct((batch, OUT), jnp.float32),
        grid=(batch // TM,),
        in_specs=[
            pl.BlockSpec((TM, LATENT), lambda i: (i, 0)),       # z tile
            pl.BlockSpec((LATENT, HIDDEN), lambda i: (0, 0)),   # w1 (bf16, resident)
            pl.BlockSpec((1, HIDDEN), lambda i: (0, 0)),        # b1 (f32)
            pl.BlockSpec((HIDDEN, OUT), lambda i: (0, 0)),      # w2 (bf16, resident)
            pl.BlockSpec((1, OUT), lambda i: (0, 0)),           # b2 (f32)
        ],
        out_specs=pl.BlockSpec((TM, OUT), lambda i: (i, 0)),
        compiler_params=pltpu.CompilerParams(
            dimension_semantics=("parallel",)),                 # v7x: split over 2 TCs
        cost_estimate=pl.CostEstimate(
            flops=flops, transcendentals=batch * OUT,
            bytes_accessed=bytes_accessed),
    )


def _loss_call(batch):
    assert batch % TM == 0, "batch must be a multiple of TM"
    inv_n = 1.0 / float(batch * OUT)
    flops = 2 * batch * (LATENT * HIDDEN + HIDDEN * OUT) + 3 * batch * OUT
    bytes_accessed = _WEIGHT_BYTES + 4 * batch * LATENT + 4 * batch * OUT + 4
    return pl.pallas_call(
        functools.partial(loss_kernel, inv_n=inv_n),
        out_shape=jax.ShapeDtypeStruct((1, 1), jnp.float32),
        grid=(batch // TM,),
        in_specs=[
            pl.BlockSpec((TM, LATENT), lambda i: (i, 0)),       # z tile
            pl.BlockSpec((TM, OUT), lambda i: (i, 0)),          # x tile (target)
            pl.BlockSpec((LATENT, HIDDEN), lambda i: (0, 0)),   # w1
            pl.BlockSpec((1, HIDDEN), lambda i: (0, 0)),        # b1
            pl.BlockSpec((HIDDEN, OUT), lambda i: (0, 0)),      # w2
            pl.BlockSpec((1, OUT), lambda i: (0, 0)),           # b2
        ],
        out_specs=pl.BlockSpec(memory_space=pltpu.MemorySpace.SMEM),  # scalar loss
        scratch_shapes=[pltpu.SMEM((1,), jnp.float32)],               # accumulator
        compiler_params=pltpu.CompilerParams(
            dimension_semantics=("arbitrary",)),                # reduction over batch
        cost_estimate=pl.CostEstimate(
            flops=flops, transcendentals=batch * OUT,
            bytes_accessed=bytes_accessed),
    )


# ---------------------------------------------------------------------------
# Wrappers (jitted — kills per-call host overhead for these µs-scale kernels)
# ---------------------------------------------------------------------------
@jax.jit
def pallas_decode(z, params):
    w1, b1, w2, b2 = params
    batch = z.shape[0]
    x_flat = _decode_call(batch)(z, w1, b1, w2, b2)
    return x_flat.reshape(batch, C, H, W)       # NCHW, matching PyTorch


@jax.jit
def pallas_reconstruction_loss(z, x_nchw, params):
    w1, b1, w2, b2 = params
    batch = z.shape[0]
    x_flat = x_nchw.reshape(batch, OUT)
    loss = _loss_call(batch)(z, x_flat, w1, b1, w2, b2)
    return loss[0, 0]


def decoder_forward(z, x=None, type="loss", params=None):
    """Mirror of Decoder.forward."""
    assert type in ["decode", "loss"], "Type could be either decode or loss"
    if type == "loss":
        return pallas_reconstruction_loss(z, x, params)
    return pallas_decode(z, params)


def init_params(key):
    k1, k2, k3, k4 = jax.random.split(key, 4)
    # Weights pre-cast to bf16 once (halves the dominant w2 HBM read);
    # biases stay f32 (elementwise math is f32 on all generations).
    w1 = (jax.random.normal(k1, (LATENT, HIDDEN), jnp.float32) * 0.05).astype(jnp.bfloat16)
    b1 = jax.random.normal(k2, (1, HIDDEN), jnp.float32) * 0.05
    w2 = (jax.random.normal(k3, (HIDDEN, OUT), jnp.float32) * 0.05).astype(jnp.bfloat16)
    b2 = jax.random.normal(k4, (1, OUT), jnp.float32) * 0.05
    return w1, b1, w2, b2


def _reference(z, x_nchw, params):
    """Pure-JAX reference (same bf16 weights, f32 activations)."""
    w1, b1, w2, b2 = params
    h = jnp.maximum(z @ w1.astype(jnp.float32) + b1, 0.0)
    x_new = jax.nn.sigmoid(h @ w2.astype(jnp.float32) + b2)
    loss = jnp.mean((x_new - x_nchw.reshape(z.shape[0], OUT)) ** 2)
    return x_new.reshape(z.shape[0], C, H, W), loss


# ---------------------------------------------------------------------------
if __name__ == "__main__":
    key = jax.random.PRNGKey(0)
    kp, kz, kx = jax.random.split(key, 3)

    params = init_params(kp)
    z = jax.random.normal(kz, (B, LATENT), jnp.float32)
    x = jax.random.uniform(kx, (B, C, H, W), jnp.float32)

    # type='decode' path
    x_new = decoder_forward(z, type="decode", params=params)
    jax.block_until_ready(x_new)
    assert x_new.shape == (B, C, H, W)

    # type='loss' path (default)
    loss = decoder_forward(z, x=x, type="loss", params=params)
    jax.block_until_ready(loss)
    assert loss.shape == ()

    # Loose correctness check vs. pure-JAX reference (bf16 matmul operands).
    x_ref, loss_ref_val = _reference(z, x, params)
    assert jnp.max(jnp.abs(x_new - x_ref)) < 0.02
    assert abs(float(loss) - float(loss_ref_val)) < 5e-3 + 0.05 * abs(float(loss_ref_val))

    print("KERNEL_OK")
</pallas_src>

<mosaic_0001>
module attributes {stable_mosaic.version = 11 : i64} {
  func.func @decode_kernel(%arg0: i32, %arg1: memref<128x128xf32, #tpu.memory_space<vmem>>, %arg2: memref<128x128xbf16, #tpu.memory_space<vmem>>, %arg3: memref<1x128xf32, #tpu.memory_space<vmem>>, %arg4: memref<128x1024xbf16, #tpu.memory_space<vmem>>, %arg5: memref<1x1024xf32, #tpu.memory_space<vmem>>, %arg6: memref<128x1024xf32, #tpu.memory_space<vmem>>) attributes {dimension_semantics = [#tpu.dimension_semantics<parallel>], iteration_bounds = array<i64: 2>, scalar_prefetch = 0 : i64, scratch_operands = 0 : i64, tpu.core_type = #tpu.core_type<tc>, window_params = [{transform_indices = @transform_0, window_bounds = array<i64: 128, 128>}, {pipeline_mode = #tpu.pipeline_mode<synchronous>, transform_indices = @transform_1, window_bounds = array<i64: 128, 128>}, {pipeline_mode = #tpu.pipeline_mode<synchronous>, transform_indices = @transform_2, window_bounds = array<i64: 1, 128>}, {pipeline_mode = #tpu.pipeline_mode<synchronous>, transform_indices = @transform_3, window_bounds = array<i64: 128, 1024>}, {pipeline_mode = #tpu.pipeline_mode<synchronous>, transform_indices = @transform_4, window_bounds = array<i64: 1, 1024>}, {transform_indices = @transform_5, window_bounds = array<i64: 128, 1024>}]} {
    %c0 = arith.constant 0 : index
    %c0_0 = arith.constant 0 : index
    %0 = vector.load %arg1[%c0, %c0_0] : memref<128x128xf32, #tpu.memory_space<vmem>>, vector<128x128xf32>
    %1 = arith.truncf %0 : vector<128x128xf32> to vector<128x128xbf16>
    %c0_1 = arith.constant 0 : index
    %c0_2 = arith.constant 0 : index
    %2 = vector.load %arg2[%c0_1, %c0_2] : memref<128x128xbf16, #tpu.memory_space<vmem>>, vector<128x128xbf16>
    %cst = arith.constant dense<0.000000e+00> : vector<128x128xf32>
    %3 = tpu.matmul %1, %2, %cst {dimension_numbers = #tpu.dot_dimension_numbers<[1], [0], [0], [1], [0, 0, 1, 1], [], []>} : vector<128x128xbf16>, vector<128x128xbf16>, vector<128x128xf32> -> vector<128x128xf32>
    %c0_3 = arith.constant 0 : index
    %c0_4 = arith.constant 0 : index
    %4 = vector.load %arg3[%c0_3, %c0_4] : memref<1x128xf32, #tpu.memory_space<vmem>>, vector<1x128xf32>
    %5 = vector.broadcast %4 : vector<1x128xf32> to vector<128x128xf32>
    %6 = arith.addf %3, %5 : vector<128x128xf32>
    %cst_5 = arith.constant 0.000000e+00 : f32
    %7 = vector.broadcast %cst_5 : f32 to vector<128x128xf32>
    %8 = arith.maximumf %6, %7 : vector<128x128xf32>
    %9 = arith.truncf %8 : vector<128x128xf32> to vector<128x128xbf16>
    %c0_6 = arith.constant 0 : index
    %c0_7 = arith.constant 0 : index
    %10 = vector.load %arg4[%c0_6, %c0_7] : memref<128x1024xbf16, #tpu.memory_space<vmem>>, vector<128x1024xbf16>
    %cst_8 = arith.constant dense<0.000000e+00> : vector<128x1024xf32>
    %11 = tpu.matmul %9, %10, %cst_8 {dimension_numbers = #tpu.dot_dimension_numbers<[1], [0], [0], [1], [0, 0, 1, 1], [], []>} : vector<128x128xbf16>, vector<128x1024xbf16>, vector<128x1024xf32> -> vector<128x1024xf32>
    %c0_9 = arith.constant 0 : index
    %c0_10 = arith.constant 0 : index
    %12 = vector.load %arg5[%c0_9, %c0_10] : memref<1x1024xf32, #tpu.memory_space<vmem>>, vector<1x1024xf32>
    %13 = vector.broadcast %12 : vector<1x1024xf32> to vector<128x1024xf32>
    %14 = arith.addf %11, %13 : vector<128x1024xf32>
    %15 = arith.negf %14 : vector<128x1024xf32>
    %16 = math.exp %15 : vector<128x1024xf32>
    %cst_11 = arith.constant 1.000000e+00 : f32
    %17 = vector.broadcast %cst_11 : f32 to vector<128x1024xf32>
    %18 = arith.addf %17, %16 : vector<128x1024xf32>
    %19 = arith.divf %17, %18 : vector<128x1024xf32>
    %c0_12 = arith.constant 0 : index
    %c0_13 = arith.constant 0 : index
    %20 = vector.load %arg6[%c0_12, %c0_13] : memref<128x1024xf32, #tpu.memory_space<vmem>>, vector<128x1024xf32>
    tpu.vector_store %arg6[%c0_12, %c0_13], %19 {strides = array<i32>} : memref<128x1024xf32, #tpu.memory_space<vmem>>, vector<128x1024xf32>,
    return
  }
  func.func @transform_0(%arg0: i32) -> (i32, i32) {
    %c0_i32 = arith.constant 0 : i32
    %c0_i32_0 = arith.constant 0 : i32
    return %arg0, %c0_i32 : i32, i32
  }
  func.func @transform_1(%arg0: i32) -> (i32, i32) {
    %c0_i32 = arith.constant 0 : i32
    %c0_i32_0 = arith.constant 0 : i32
    %c0_i32_1 = arith.constant 0 : i32
    return %c0_i32, %c0_i32_0 : i32, i32
  }
  func.func @transform_2(%arg0: i32) -> (i32, i32) {
    %c0_i32 = arith.constant 0 : i32
    %c0_i32_0 = arith.constant 0 : i32
    %c0_i32_1 = arith.constant 0 : i32
    return %c0_i32, %c0_i32_0 : i32, i32
  }
  func.func @transform_3(%arg0: i32) -> (i32, i32) {
    %c0_i32 = arith.constant 0 : i32
    %c0_i32_0 = arith.constant 0 : i32
    %c0_i32_1 = arith.constant 0 : i32
    return %c0_i32, %c0_i32_0 : i32, i32
  }
  func.func @transform_4(%arg0: i32) -> (i32, i32) {
    %c0_i32 = arith.constant 0 : i32
    %c0_i32_0 = arith.constant 0 : i32
    %c0_i32_1 = arith.constant 0 : i32
    return %c0_i32, %c0_i32_0 : i32, i32
  }
  func.func @transform_5(%arg0: i32) -> (i32, i32) {
    %c0_i32 = arith.constant 0 : i32
    %c0_i32_0 = arith.constant 0 : i32
    return %arg0, %c0_i32 : i32, i32
  }
}

</mosaic_0001>

<llo_original>
// kernel: pallas_decode.1
$region0: #{pallas_decode.1}
  #allocation0 [shape = 'u32[]', space=smem, size = 0x4, offset = 0x4, fixed_abs, tag = 'smem constant byte address 0x4 - core index']
  #allocation1 [shape = 'u32[144,128]{1,0:T(1,128)}', space=vmem, size = 0x12000, scoped, tag = 'internal scratch']
  %s0 = inlined_call_operand.hbm [shape: f32[256,128], index: 0, kind: input, shape index: {}]
  %s1 = inlined_call_operand.hbm [shape: bf16[128,128], index: 1, kind: input, shape index: {}]
  %s2 = inlined_call_operand.vmem [shape: f32[1,128], index: 2, kind: input, shape index: {}]
  %s3 = inlined_call_operand.hbm [shape: bf16[128,1024], index: 3, kind: input, shape index: {}]
  %s4 = inlined_call_operand.vmem [shape: f32[1,1024], index: 4, kind: input, shape index: {}]
  %s5 = inlined_call_operand.vmem [shape: f32[256,1024], index: 5, kind: output, shape index: {}]
  %s6 = sld [smem:[#allocation0]]
  $region65: #{pallas_decode.1} parent=0
    _
  %s8 = ssub.s32 1, %s6
  %s9 = scalar_select 0, %s8, %s6
  $region1: #{pallas_decode.1} parent=0
    #allocation2 [shape = 'u8[131072]{0}', space=vmem, size = 0x20000, scoped, tag = 'input window, operand 0']
    #allocation3 [shape = 's32[2]{0}', space=sflag, size = 0x8, scoped, tag = 'scoped memory for pallas_decode.1']
    #allocation4 [shape = 'u8[32768]{0}', space=vmem, size = 0x8000, scoped, tag = 'input window, operand 1, single buffered']
    #allocation5 [shape = 's32[1]{0}', space=sflag, size = 0x4, scoped, tag = 'scoped memory for pallas_decode.1']
    #allocation6 [shape = 'u8[262144]{0}', space=vmem, size = 0x40000, scoped, tag = 'input window, operand 3, single buffered']
    %10 = vsyncpa [#allocation3], 0
    %s11 = scalar_lea.sflag [#allocation3], 1
    %12 = vsyncpa %s11, 0
    %13 = vsyncpa [#allocation5], 0
    loop: start=0, step=1, limit=4
    $region2: #{pallas_decode.1} parent=1 // loop_pre_header
      _
    $region3: #{pallas_decode.1} parent=1 // loop_header
      %s15 = sphi 0, %s19
      %p16 = scmp.ge.s32.totalorder %s15, 4
      %s25 = sphi 0, %s27
      %s28 = sphi 0, %s25
      %s29 = sphi 0, %s28
      %s45 = sphi 0, %s29
      %s49 = sphi 0, %s49
      %s51 = sphi 0, %s49
      %s52 = sphi 0, %s51
      %s66 = sphi 0, %s52
      %s70 = sphi 0, %s70
      %s72 = sphi 0, %s70
      %s73 = sphi 0, %s72
      %s87 = sphi 0, %s73
      %s91 = sphi 0, %s91
      %s93 = sphi 0, %s91
      %s94 = sphi 0, %s93
      %s108 = sphi 0, %s94
      %s112 = sphi 0, %s112
      %s114 = sphi 0, %s112
      %s115 = sphi 0, %s114
      %s129 = sphi 0, %s115
      %s135 = sphi 0, %s137
      %s138 = sphi 0, %s135
      %s139 = sphi 0, %s138
      %s155 = sphi 0, %s139
    $region4: #{pallas_decode.1} parent=1 // loop_header_branch
      %18 = sbr.rel (%p16) target = $region8
    $region5: #{pallas_decode.1} parent=1 // loop_body
      %s20 = ssub.s32 %s15, 1
      %s21 = ssub.s32 %s15, 2
      %s22 = sadd.s32 %s15, 1
      %s23 = ssub.s32 %s15, %s22
      %p24 = scmp.eq.s32.totalorder %s23, 0
      %s26 = sadd.s32 %s25, 1
      %s27 = scalar_select %p24, %s25, %s26
      %p30 = pneg %p24
      %p31 = scmp.eq.s32.totalorder %s15, 1
      %p32 = por %p30, %p31
      %p33 = scmp.ne.s32.totalorder %s25, %s28
      %p34 = scmp.eq.s32.totalorder %s15, 0
      %p35 = por %p33, %p34
      %p36 = scmp.ne.s32.totalorder %s25, %s28
      %p37 = scmp.eq.s32.totalorder %s20, 1
      %p38 = por %p36, %p37
      %p39 = scmp.ne.s32.totalorder %s28, %s29
      %p40 = scmp.eq.s32.totalorder %s20, 0
      %p41 = por %p39, %p40
      %p42 = scmp.ne.s32.totalorder %s28, %s29
      %p43 = scmp.eq.s32.totalorder %s21, 1
      %p44 = por %p42, %p43
      %p46 = scmp.ne.s32.totalorder %s29, %s45
      %p47 = scmp.eq.s32.totalorder %s21, 0
      %p48 = por %p46, %p47
      %s50 = sadd.s32 %s49, 1
      %p53 = scmp.eq.s32.totalorder %s15, 1
      %p54 = scmp.ne.s32.totalorder %s49, %s51
      %p55 = scmp.eq.s32.totalorder %s15, 0
      %p56 = por %p54, %p55
      %p57 = scmp.ne.s32.totalorder %s49, %s51
      %p58 = scmp.eq.s32.totalorder %s20, 1
      %p59 = por %p57, %p58
      %p60 = scmp.ne.s32.totalorder %s51, %s52
      %p61 = scmp.eq.s32.totalorder %s20, 0
      %p62 = por %p60, %p61
      %p63 = scmp.ne.s32.totalorder %s51, %s52
      %p64 = scmp.eq.s32.totalorder %s21, 1
      %p65 = por %p63, %p64
      %p67 = scmp.ne.s32.totalorder %s52, %s66
      %p68 = scmp.eq.s32.totalorder %s21, 0
      %p69 = por %p67, %p68
      %s71 = sadd.s32 %s70, 1
      %p74 = scmp.eq.s32.totalorder %s15, 1
      %p75 = scmp.ne.s32.totalorder %s70, %s72
      %p76 = scmp.eq.s32.totalorder %s15, 0
      %p77 = por %p75, %p76
      %p78 = scmp.ne.s32.totalorder %s70, %s72
      %p79 = scmp.eq.s32.totalorder %s20, 1
      %p80 = por %p78, %p79
      %p81 = scmp.ne.s32.totalorder %s72, %s73
      %p82 = scmp.eq.s32.totalorder %s20, 0
      %p83 = por %p81, %p82
      %p84 = scmp.ne.s32.totalorder %s72, %s73
      %p85 = scmp.eq.s32.totalorder %s21, 1
      %p86 = por %p84, %p85
      %p88 = scmp.ne.s32.totalorder %s73, %s87
      %p89 = scmp.eq.s32.totalorder %s21, 0
      %p90 = por %p88, %p89
      %s92 = sadd.s32 %s91, 1
      %p95 = scmp.eq.s32.totalorder %s15, 1
      %p96 = scmp.ne.s32.totalorder %s91, %s93
      %p97 = scmp.eq.s32.totalorder %s15, 0
      %p98 = por %p96, %p97
      %p99 = scmp.ne.s32.totalorder %s91, %s93
      %p100 = scmp.eq.s32.totalorder %s20, 1
      %p101 = por %p99, %p100
      %p102 = scmp.ne.s32.totalorder %s93, %s94
      %p103 = scmp.eq.s32.totalorder %s20, 0
      %p104 = por %p102, %p103
      %p105 = scmp.ne.s32.totalorder %s93, %s94
      %p106 = scmp.eq.s32.totalorder %s21, 1
      %p107 = por %p105, %p106
      %p109 = scmp.ne.s32.totalorder %s94, %s108
      %p110 = scmp.eq.s32.totalorder %s21, 0
      %p111 = por %p109, %p110
      %s113 = sadd.s32 %s112, 1
      %p116 = scmp.eq.s32.totalorder %s15, 1
      %p117 = scmp.ne.s32.totalorder %s112, %s114
      %p118 = scmp.eq.s32.totalorder %s15, 0
      %p119 = por %p117, %p118
      %p120 = scmp.ne.s32.totalorder %s112, %s114
      %p121 = scmp.eq.s32.totalorder %s20, 1
      %p122 = por %p120, %p121
      %p123 = scmp.ne.s32.totalorder %s114, %s115
      %p124 = scmp.eq.s32.totalorder %s20, 0
      %p125 = por %p123, %p124
      %p126 = scmp.ne.s32.totalorder %s114, %s115
      %p127 = scmp.eq.s32.totalorder %s21, 1
      %p128 = por %p126, %p127
      %p130 = scmp.ne.s32.totalorder %s115, %s129
      %p131 = scmp.eq.s32.totalorder %s21, 0
      %p132 = por %p130, %p131
      %s133 = ssub.s32 %s15, %s22
      %p134 = scmp.eq.s32.totalorder %s133, 0
      %s136 = sadd.s32 %s135, 1
      %s137 = scalar_select %p134, %s135, %s136
      %p140 = pneg %p134
      %p141 = scmp.eq.s32.totalorder %s15, 1
      %p142 = por %p140, %p141
      %p143 = scmp.ne.s32.totalorder %s135, %s138
      %p144 = scmp.eq.s32.totalorder %s15, 0
      %p145 = por %p143, %p144
      %p146 = scmp.ne.s32.totalorder %s135, %s138
      %p147 = scmp.eq.s32.totalorder %s20, 1
      %p148 = por %p146, %p147
      %p149 = scmp.ne.s32.totalorder %s138, %s139
      %p150 = scmp.eq.s32.totalorder %s20, 0
      %p151 = por %p149, %p150
      %p152 = scmp.ne.s32.totalorder %s138, %s139
      %p153 = scmp.eq.s32.totalorder %s21, 1
      %p154 = por %p152, %p153
      %p156 = scmp.ne.s32.totalorder %s139, %s155
      %p157 = scmp.eq.s32.totalorder %s21, 0
      %p158 = por %p156, %p157
      %p159 = scmp.le.s32.totalorder 1, %s15
      %p160 = scmp.lt.s32.totalorder %s15, 3
      %p161 = pnand %p159, %p160
      %p162 = pneg %p161
      // Predicated region
      $region9: #{pallas_decode.1} parent=5 // pred_check
        _
      $region10: #{pallas_decode.1} parent=5 // pred_check_branch
        %164 = sbr.rel (%p161) target = $region12
      $region11: #{pallas_decode.1} parent=5 // pred_region
        %s165 = ssub.s32 %s15, 1
        // Predicated region
        $region13: #{pallas_decode.1} parent=11 // pred_check
          %p166 = pneg %p62
        $region14: #{pallas_decode.1} parent=11 // pred_check_branch
          %168 = sbr.rel (%p166) target = $region16
        $region15: #{pallas_decode.1} parent=11 // pred_region
          %s170 = ssub.s32 1024, 1024
          %171 = vsyncadd [#allocation5], %s170
          %s172 = sshll.u32 [#allocation4], 4
          %s173 = int_to_ptr.vmem [resolvable:$true] %s172
          %178 = dma.hbm_to_vmem [thread:$0]  %s1, 1024, %s173, [#allocation5], 64, 64, 4
        $region16: #{pallas_decode.1} parent=11 // pred_fallthru
          _
        // Predicated region
        $region17: #{pallas_decode.1} parent=11 // pred_check
          %p179 = pneg %p83
        $region18: #{pallas_decode.1} parent=11 // pred_check_branch
          %181 = sbr.rel (%p179) target = $region20
        $region19: #{pallas_decode.1} parent=11 // pred_region
          _
        $region20: #{pallas_decode.1} parent=11 // pred_fallthru
          _
        // Predicated region
        $region21: #{pallas_decode.1} parent=11 // pred_check
          %p182 = pneg %p104
        $region22: #{pallas_decode.1} parent=11 // pred_check_branch
          %184 = sbr.rel (%p182) target = $region24
        $region23: #{pallas_decode.1} parent=11 // pred_region
          %s186 = ssub.s32 8192, 8192
          %187 = vsyncadd [#allocation5], %s186
          %s188 = sshll.u32 [#allocation6], 4
          %s189 = int_to_ptr.vmem [resolvable:$true] %s188
          %194 = dma.hbm_to_vmem [thread:$0]  %s3, 8192, %s189, [#allocation5], 512, 512, 32
        $region24: #{pallas_decode.1} parent=11 // pred_fallthru
          _
        // Predicated region
        $region25: #{pallas_decode.1} parent=11 // pred_check
          %p195 = pneg %p125
        $region26: #{pallas_decode.1} parent=11 // pred_check_branch
          %197 = sbr.rel (%p195) target = $region28
        $region27: #{pallas_decode.1} parent=11 // pred_region
          _
        $region28: #{pallas_decode.1} parent=11 // pred_fallthru
          _
      $region12: #{pallas_decode.1} parent=5 // pred_fallthru
        _
      %p198 = scmp.lt.s32.totalorder %s15, 2
      // Predicated region
      $region29: #{pallas_decode.1} parent=5 // pred_check
        %p199 = pneg %p198
      $region30: #{pallas_decode.1} parent=5 // pred_check_branch
        %201 = sbr.rel (%p199) target = $region32
      $region31: #{pallas_decode.1} parent=5 // pred_region
        // Predicated region
        $region33: #{pallas_decode.1} parent=31 // pred_check
          %p202 = pneg %p35
        $region34: #{pallas_decode.1} parent=31 // pred_check_branch
          %204 = sbr.rel (%p202) target = $region36
        $region35: #{pallas_decode.1} parent=31 // pred_region
          %s205 = sand.u32 %s25, 1
          %s206 = scalar_lea.sflag [#allocation3], %s205
          %s207 = sand.u32 %s25, 1
          %s208 = smul.addr %s207, 128
          %s209 = scalar_lea.vmem [#allocation2], %s208
          %s210 = smul.u32 16, %s15
          %s212 = ssub.s32 2048, 2048
          %213 = vsyncadd %s206, %s212
          %s214 = smul.addr %s210, 128
          %s215 = scalar_lea.hbm %s0, %s214
          %s216 = sshll.u32 %s209, 4
          %s217 = int_to_ptr.vmem [resolvable:$true] %s216
          %222 = dma.hbm_to_vmem [thread:$0]  %s215, 2048, %s217, %s206, 128, 128, 8
        $region36: #{pallas_decode.1} parent=31 // pred_fallthru
          _
      $region32: #{pallas_decode.1} parent=5 // pred_fallthru
        _
      %p223 = scmp.le.s32.totalorder 1, %s15
      %p224 = scmp.lt.s32.totalorder %s15, 3
      %p225 = pnand %p223, %p224
      %p226 = pneg %p225
      // Predicated region
      $region37: #{pallas_decode.1} parent=5 // pred_check
        _
      $region38: #{pallas_decode.1} parent=5 // pred_check_branch
        %228 = sbr.rel (%p225) target = $region40
      $region39: #{pallas_decode.1} parent=5 // pred_region
        %s229 = ssub.s32 %s15, 1
        %s230 = sand.u32 %s28, 1
        %s231 = scalar_lea.sflag [#allocation3], %s230
        %s232 = sand.u32 %s28, 1
        %s233 = smul.addr %s232, 128
        %s234 = scalar_lea.vmem [#allocation2], %s233
        // Predicated region
        $region41: #{pallas_decode.1} parent=39 // pred_check
          %p235 = pneg %p41
        $region42: #{pallas_decode.1} parent=39 // pred_check_branch
          %237 = sbr.rel (%p235) target = $region44
        $region43: #{pallas_decode.1} parent=39 // pred_region
          %238 = dma.done %s231, 2048
        $region44: #{pallas_decode.1} parent=39 // pred_fallthru
          _
        // Predicated region
        $region45: #{pallas_decode.1} parent=39 // pred_check
          %p239 = pneg %p62
        $region46: #{pallas_decode.1} parent=39 // pred_check_branch
          %241 = sbr.rel (%p239) target = $region48
        $region47: #{pallas_decode.1} parent=39 // pred_region
          %242 = dma.done [#allocation5], 1024
        $region48: #{pallas_decode.1} parent=39 // pred_fallthru
          _
        // Predicated region
        $region49: #{pallas_decode.1} parent=39 // pred_check
          %p243 = pneg %p104
        $region50: #{pallas_decode.1} parent=39 // pred_check_branch
          %245 = sbr.rel (%p243) target = $region52
        $region51: #{pallas_decode.1} parent=39 // pred_region
          %246 = dma.done [#allocation5], 8192
        $region52: #{pallas_decode.1} parent=39 // pred_fallthru
          _
        %s247 = sand.u32 %s28, 1
        %s248 = scalar_lea.sflag [#allocation3], %s247
        %s249 = sand.u32 %s28, 1
        %s250 = smul.addr %s249, 128
        %s251 = scalar_lea.vmem [#allocation2], %s250
        %p252 = pneg %p41
        %p253 = pneg %p38
        %p254 = pneg %p62
        %p255 = pneg %p59
        %p256 = pneg %p83
        %p257 = pneg %p80
        %p258 = pneg %p104
        %p259 = pneg %p101
        %p260 = pneg %p125
        %p261 = pneg %p122
        %p262 = pneg %p151
        %p263 = pneg %p148
        %s264 = smul.u32 16, %s20
        %p265 = scmp.lt.s32.totalorder %s264, 31
        %s266 = scalar_select %p265, %s264, 31
        %s267 = smul.addr %s266, 8
        %s268 = smul.addr %s267, 8
        %s269 = scalar_lea.vmem %s5, %s268
        %s270 = smul.u32 16, %s20
        %s271 = smul.u32 16, %s20
        %p272 = scmp.lt.s32.totalorder %s271, 31
        %s273 = scalar_select %p272, %s271, 31
        %s274 = smul.addr %s273, 8
        %s275 = smul.addr %s274, 8
        %s276 = scalar_lea.vmem %s5, %s275
        %s277 = smul.u32 16, %s20
        %v279 = vld [vmem:[%s234] sm:$0xff]
        %v280 = vld [vmem:[%s234 + $0x8] sm:$0xff]
        %v281 = vld [vmem:[%s234 + $0x10] sm:$0xff]
        %v282 = vld [vmem:[%s234 + $0x18] sm:$0xff]
        %v283 = vld [vmem:[%s234 + $0x20] sm:$0xff]
        %v284 = vld [vmem:[%s234 + $0x28] sm:$0xff]
        %v285 = vld [vmem:[%s234 + $0x30] sm:$0xff]
        %v286 = vld [vmem:[%s234 + $0x38] sm:$0xff]
        %v287 = vld [vmem:[%s234 + $0x40] sm:$0xff]
        %v288 = vld [vmem:[%s234 + $0x48] sm:$0xff]
        %v289 = vld [vmem:[%s234 + $0x50] sm:$0xff]
        %v290 = vld [vmem:[%s234 + $0x58] sm:$0xff]
        %v291 = vld [vmem:[%s234 + $0x60] sm:$0xff]
        %v292 = vld [vmem:[%s234 + $0x68] sm:$0xff]
        %v293 = vld [vmem:[%s234 + $0x70] sm:$0xff]
        %v294 = vld [vmem:[%s234 + $0x78] sm:$0xff]
        %v295 = vpack.c.bf16 %v280, %v279
        %v296 = vpack.c.bf16 %v282, %v281
        %v297 = vpack.c.bf16 %v284, %v283
        %v298 = vpack.c.bf16 %v286, %v285
        %v299 = vpack.c.bf16 %v288, %v287
        %v300 = vpack.c.bf16 %v290, %v289
        %v301 = vpack.c.bf16 %v292, %v291
        %v302 = vpack.c.bf16 %v294, %v293
        %v303 = vld [vmem:[#allocation4] sm:$0xf]
        %v304 = vld [vmem:[#allocation4 + $0x4] sm:$0xf]
        %v305 = vld [vmem:[#allocation4 + $0x8] sm:$0xf]
        %v306 = vld [vmem:[#allocation4 + $0xc] sm:$0xf]
        %v307 = vld [vmem:[#allocation4 + $0x10] sm:$0xf]
        %v308 = vld [vmem:[#allocation4 + $0x14] sm:$0xf]
        %v309 = vld [vmem:[#allocation4 + $0x18] sm:$0xf]
        %v310 = vld [vmem:[#allocation4 + $0x1c] sm:$0xf]
        %v311 = vld [vmem:[#allocation4 + $0x20] sm:$0xf]
        %v312 = vld [vmem:[#allocation4 + $0x24] sm:$0xf]
        %v313 = vld [vmem:[#allocation4 + $0x28] sm:$0xf]
        %v314 = vld [vmem:[#allocation4 + $0x2c] sm:$0xf]
        %v315 = vld [vmem:[#allocation4 + $0x30] sm:$0xf]
        %v316 = vld [vmem:[#allocation4 + $0x34] sm:$0xf]
        %v317 = vld [vmem:[#allocation4 + $0x38] sm:$0xf]
        %v318 = vld [vmem:[#allocation4 + $0x3c] sm:$0xf]
        %v319 = vld [vmem:[%s2] sm:$0x1]
        %v321 = vlaneseq
        %v322 = vshrl.u32 %v321, 7
        %v323 = vsub.s32 0, %v322
        %v324 = vrot.slane %v319, %v323
        %v342 = vunpack.c.l.b16 %v303
        %v343 = vunpack.c.l.b16 %v304
        %v344 = vunpack.c.l.b16 %v305
        %v345 = vunpack.c.l.b16 %v306
        %v346 = vunpack.c.l.b16 %v307
        %v347 = vunpack.c.l.b16 %v308
        %v348 = vunpack.c.l.b16 %v309
        %v349 = vunpack.c.l.b16 %v310
        %v350 = vunpack.c.l.b16 %v311
        %v351 = vunpack.c.l.b16 %v312
        %v352 = vunpack.c.l.b16 %v313
        %v353 = vunpack.c.l.b16 %v314
        %v354 = vunpack.c.l.b16 %v315
        %v355 = vunpack.c.l.b16 %v316
        %v356 = vunpack.c.l.b16 %v317
        %v357 = vunpack.c.l.b16 %v318
        %v358 = vpack.c.b16 %v343, %v342
        %v359 = vpack.c.b16 %v345, %v344
        %v360 = vpack.c.b16 %v347, %v346
        %v361 = vpack.c.b16 %v349, %v348
        %v362 = vpack.c.b16 %v351, %v350
        %v363 = vpack.c.b16 %v353, %v352
        %v364 = vpack.c.b16 %v355, %v354
        %v365 = vpack.c.b16 %v357, %v356
        %374 = vmatprep.subr.bf16.mxu0 0
        %375 = vmatpush1.bf16.msra.mxu0 %v358
        %376 = vmatprep.subr.bf16.mxu0 0
        %377 = vmatpush1.bf16.msra.mxu0 %v359
        %378 = vmatprep.subr.bf16.mxu0 0
        %379 = vmatpush1.bf16.msra.mxu0 %v360
        %380 = vmatprep.subr.bf16.mxu0 0
        %381 = vmatpush1.bf16.msra.mxu0 %v361
        %382 = vmatprep.subr.bf16.mxu0 0
        %383 = vmatpush1.bf16.msra.mxu0 %v362
        %384 = vmatprep.subr.bf16.mxu0 0
        %385 = vmatpush1.bf16.msra.mxu0 %v363
        %386 = vmatprep.subr.bf16.mxu0 0
        %387 = vmatpush1.bf16.msra.mxu0 %v364
        %388 = vmatprep.subr.bf16.mxu0 0
        %389 = vmatpush1.bf16.msra.mxu0 %v365
        %390 = vmatprep.subr.bf16.mxu0 0
        %391 = vmatpush1.bf16.msra.mxu0 0
        %392 = vmatprep.subr.bf16.mxu0 0
        %393 = vmatpush1.bf16.msra.mxu0 0
        %394 = vmatprep.subr.bf16.mxu0 0
        %395 = vmatpush1.bf16.msra.mxu0 0
        %396 = vmatprep.subr.bf16.mxu0 0
        %397 = vmatpush1.bf16.msra.mxu0 0
        %398 = vmatprep.subr.bf16.mxu0 0
        %399 = vmatpush1.bf16.msra.mxu0 0
        %400 = vmatprep.subr.bf16.mxu0 0
        %401 = vmatpush1.bf16.msra.mxu0 0
        %402 = vmatprep.subr.bf16.mxu0 0
        %403 = vmatpush1.bf16.msra.mxu0 0
        %404 = vmatprep.subr.bf16.mxu0 0
        %405 = vmatpush1.bf16.msra.mxu0 0
        %406 = vmatprep.mubr.bf16.mxu0 0
        %407 = vmatmul.mubr.bf16.gmra.mrb[0].mxu0 %v295
        %v408 = vpop.f32.mrb[0].mxu0
        %v409 = vadd.f32 %v324, %v408
        %v410 = vpop.f32.mrb[0].mxu0
        %v411 = vpop.f32.mrb[0].mxu0
        %v412 = vadd.f32 %v324, %v411
        %v413 = vpop.f32.mrb[0].mxu0
        %414 = vmatprep.mubr.bf16.mxu0 0
        %415 = vmatmul.mubr.bf16.gmra.mrb[0].mxu0 %v296
        %v416 = vpop.f32.mrb[0].mxu0
        %v417 = vadd.f32 %v324, %v416
        %v418 = vpop.f32.mrb[0].mxu0
        %v419 = vpop.f32.mrb[0].mxu0
        %v420 = vadd.f32 %v324, %v419
        %v421 = vpop.f32.mrb[0].mxu0
        %422 = vmatprep.mubr.bf16.mxu0 0
        %423 = vmatmul.mubr.bf16.gmra.mrb[0].mxu0 %v297
        %v424 = vpop.f32.mrb[0].mxu0
        %v425 = vadd.f32 %v324, %v424
        %v426 = vpop.f32.mrb[0].mxu0
        %v427 = vpop.f32.mrb[0].mxu0
        %v428 = vadd.f32 %v324, %v427
        %v429 = vpop.f32.mrb[0].mxu0
        %430 = vmatprep.mubr.bf16.mxu0 0
        %431 = vmatmul.mubr.bf16.gmra.mrb[0].mxu0 %v298
        %v432 = vpop.f32.mrb[0].mxu0
        %v433 = vadd.f32 %v324, %v432
        %v434 = vpop.f32.mrb[0].mxu0
        %v435 = vpop.f32.mrb[0].mxu0
        %v436 = vadd.f32 %v324, %v435
        %v437 = vpop.f32.mrb[0].mxu0
        %438 = vmatprep.mubr.bf16.mxu0 0
        %439 = vmatmul.mubr.bf16.gmra.mrb[0].mxu0 %v299
        %v440 = vpop.f32.mrb[0].mxu0
        %v441 = vadd.f32 %v324, %v440
        %v442 = vpop.f32.mrb[0].mxu0
        %v443 = vpop.f32.mrb[0].mxu0
        %v444 = vadd.f32 %v324, %v443
        %v445 = vpop.f32.mrb[0].mxu0
        %446 = vmatprep.mubr.bf16.mxu0 0
        %447 = vmatmul.mubr.bf16.gmra.mrb[0].mxu0 %v300
        %v448 = vpop.f32.mrb[0].mxu0
        %v449 = vadd.f32 %v324, %v448
        %v450 = vpop.f32.mrb[0].mxu0
        %v451 = vpop.f32.mrb[0].mxu0
        %v452 = vadd.f32 %v324, %v451
        %v453 = vpop.f32.mrb[0].mxu0
        %454 = vmatprep.mubr.bf16.mxu0 0
        %455 = vmatmul.mubr.bf16.gmra.mrb[0].mxu0 %v301
        %v456 = vpop.f32.mrb[0].mxu0
        %v457 = vadd.f32 %v324, %v456
        %v458 = vpop.f32.mrb[0].mxu0
        %v459 = vpop.f32.mrb[0].mxu0
        %v460 = vadd.f32 %v324, %v459
        %v461 = vpop.f32.mrb[0].mxu0
        %462 = vmatprep.mubr.bf16.mxu0 0
        %463 = vmatmul.mubr.bf16.gmra.mrb[0].mxu0 %v302
        %v464 = vpop.f32.mrb[0].mxu0
        %v465 = vadd.f32 %v324, %v464
        %v466 = vpop.f32.mrb[0].mxu0
        %v467 = vpop.f32.mrb[0].mxu0
        %v468 = vadd.f32 %v324, %v467
        %v469 = vpop.f32.mrb[0].mxu0
        %470 = vdwg.mxu0
        %v471 = vmax.f32 %v409, 0.0
        %v472 = vmax.f32 %v412, 0.0
        %v473 = vmax.f32 %v417, 0.0
        %v474 = vmax.f32 %v420, 0.0
        %v475 = vmax.f32 %v425, 0.0
        %v476 = vmax.f32 %v428, 0.0
        %v477 = vmax.f32 %v433, 0.0
        %v478 = vmax.f32 %v436, 0.0
        %v479 = vmax.f32 %v441, 0.0
        %v480 = vmax.f32 %v444, 0.0
        %v481 = vmax.f32 %v449, 0.0
        %v482 = vmax.f32 %v452, 0.0
        %v483 = vmax.f32 %v457, 0.0
        %v484 = vmax.f32 %v460, 0.0
        %v485 = vmax.f32 %v465, 0.0
        %v486 = vmax.f32 %v468, 0.0
        %v487 = vpack.c.bf16 %v472, %v471
        %v488 = vpack.c.bf16 %v474, %v473
        %v489 = vpack.c.bf16 %v476, %v475
        %v490 = vpack.c.bf16 %v478, %v477
        %v491 = vpack.c.bf16 %v480, %v479
        %v492 = vpack.c.bf16 %v482, %v481
        %v493 = vpack.c.bf16 %v484, %v483
        %v494 = vpack.c.bf16 %v486, %v485
        %v495 = vld [vmem:[#allocation6] sm:$0xff]
        %v496 = vld [vmem:[#allocation6 + $0x8] sm:$0xff]
        %v497 = vld [vmem:[#allocation6 + $0x10] sm:$0xff]
        %v498 = vld [vmem:[#allocation6 + $0x18] sm:$0xff]
        %v499 = vld [vmem:[#allocation6 + $0x20] sm:$0xff]
        %v500 = vld [vmem:[#allocation6 + $0x28] sm:$0xff]
        %v501 = vld [vmem:[#allocation6 + $0x30] sm:$0xff]
        %v502 = vld [vmem:[#allocation6 + $0x38] sm:$0xff]
        %v503 = vld [vmem:[#allocation6 + $0x40] sm:$0xff]
        %v504 = vld [vmem:[#allocation6 + $0x48] sm:$0xff]
        %v505 = vld [vmem:[#allocation6 + $0x50] sm:$0xff]
        %v506 = vld [vmem:[#allocation6 + $0x58] sm:$0xff]
        %v507 = vld [vmem:[#allocation6 + $0x60] sm:$0xff]
        %v508 = vld [vmem:[#allocation6 + $0x68] sm:$0xff]
        %v509 = vld [vmem:[#allocation6 + $0x70] sm:$0xff]
        %v510 = vld [vmem:[#allocation6 + $0x78] sm:$0xff]
        %v511 = vld [vmem:[#allocation6 + $0x80] sm:$0xff]
        %v512 = vld [vmem:[#allocation6 + $0x88] sm:$0xff]
        %v513 = vld [vmem:[#allocation6 + $0x90] sm:$0xff]
        %v514 = vld [vmem:[#allocation6 + $0x98] sm:$0xff]
        %v515 = vld [vmem:[#allocation6 + $0xa0] sm:$0xff]
        %v516 = vld [vmem:[#allocation6 + $0xa8] sm:$0xff]
        %v517 = vld [vmem:[#allocation6 + $0xb0] sm:$0xff]
        %v518 = vld [vmem:[#allocation6 + $0xb8] sm:$0xff]
        %v519 = vld [vmem:[#allocation6 + $0xc0] sm:$0xff]
        %v520 = vld [vmem:[#allocation6 + $0xc8] sm:$0xff]
        %v521 = vld [vmem:[#allocation6 + $0xd0] sm:$0xff]
        %v522 = vld [vmem:[#allocation6 + $0xd8] sm:$0xff]
        %v523 = vld [vmem:[#allocation6 + $0xe0] sm:$0xff]
        %v524 = vld [vmem:[#allocation6 + $0xe8] sm:$0xff]
        %v525 = vld [vmem:[#allocation6 + $0xf0] sm:$0xff]
        %v526 = vld [vmem:[#allocation6 + $0xf8] sm:$0xff]
        %v527 = vld [vmem:[#allocation6 + $0x100] sm:$0xff]
        %v528 = vld [vmem:[#allocation6 + $0x108] sm:$0xff]
        %v529 = vld [vmem:[#allocation6 + $0x110] sm:$0xff]
        %v530 = vld [vmem:[#allocation6 + $0x118] sm:$0xff]
        %v531 = vld [vmem:[#allocation6 + $0x120] sm:$0xff]
        %v532 = vld [vmem:[#allocation6 + $0x128] sm:$0xff]
        %v533 = vld [vmem:[#allocation6 + $0x130] sm:$0xff]
        %v534 = vld [vmem:[#allocation6 + $0x138] sm:$0xff]
        %v535 = vld [vmem:[#allocation6 + $0x140] sm:$0xff]
        %v536 = vld [vmem:[#allocation6 + $0x148] sm:$0xff]
        %v537 = vld [vmem:[#allocation6 + $0x150] sm:$0xff]
        %v538 = vld [vmem:[#allocation6 + $0x158] sm:$0xff]
        %v539 = vld [vmem:[#allocation6 + $0x160] sm:$0xff]
        %v540 = vld [vmem:[#allocation6 + $0x168] sm:$0xff]
        %v541 = vld [vmem:[#allocation6 + $0x170] sm:$0xff]
        %v542 = vld [vmem:[#allocation6 + $0x178] sm:$0xff]
        %v543 = vld [vmem:[#allocation6 + $0x180] sm:$0xff]
        %v544 = vld [vmem:[#allocation6 + $0x188] sm:$0xff]
        %v545 = vld [vmem:[#allocation6 + $0x190] sm:$0xff]
        %v546 = vld [vmem:[#allocation6 + $0x198] sm:$0xff]
        %v547 = vld [vmem:[#allocation6 + $0x1a0] sm:$0xff]
        %v548 = vld [vmem:[#allocation6 + $0x1a8] sm:$0xff]
        %v549 = vld [vmem:[#allocation6 + $0x1b0] sm:$0xff]
        %v550 = vld [vmem:[#allocation6 + $0x1b8] sm:$0xff]
        %v551 = vld [vmem:[#allocation6 + $0x1c0] sm:$0xff]
        %v552 = vld [vmem:[#allocation6 + $0x1c8] sm:$0xff]
        %v553 = vld [vmem:[#allocation6 + $0x1d0] sm:$0xff]
        %v554 = vld [vmem:[#allocation6 + $0x1d8] sm:$0xff]
        %v555 = vld [vmem:[#allocation6 + $0x1e0] sm:$0xff]
        %v556 = vld [vmem:[#allocation6 + $0x1e8] sm:$0xff]
        %v557 = vld [vmem:[#allocation6 + $0x1f0] sm:$0xff]
        %v558 = vld [vmem:[#allocation6 + $0x1f8] sm:$0xff]
        %v559 = vld [vmem:[%s4] sm:$0xff]
        %v561 = vlaneseq
        %v562 = vshrl.u32 %v561, 7
        %v563 = vsub.s32 0, %v562
        %v564 = vrot.slane %v559, %v563
        %v565 = vlaneseq
        %v566 = vshrl.u32 %v565, 7
        %v567 = vsub.s32 1, %v566
        %v568 = vrot.slane %v559, %v567
        %v569 = vlaneseq
        %v570 = vshrl.u32 %v569, 7
        %v571 = vsub.s32 2, %v570
        %v572 = vrot.slane %v559, %v571
        %v573 = vlaneseq
        %v574 = vshrl.u32 %v573, 7
        %v575 = vsub.s32 3, %v574
        %v576 = vrot.slane %v559, %v575
        %v577 = vlaneseq
        %v578 = vshrl.u32 %v577, 7
        %v579 = vsub.s32 4, %v578
        %v580 = vrot.slane %v559, %v579
        %v581 = vlaneseq
        %v582 = vshrl.u32 %v581, 7
        %v583 = vsub.s32 5, %v582
        %v584 = vrot.slane %v559, %v583
        %v585 = vlaneseq
        %v586 = vshrl.u32 %v585, 7
        %v587 = vsub.s32 6, %v586
        %v588 = vrot.slane %v559, %v587
        %v589 = vlaneseq
        %v590 = vshrl.u32 %v589, 7
        %v591 = vsub.s32 7, %v590
        %v592 = vrot.slane %v559, %v591
        %v665 = vunpack.c.l.b16 %v495
        %v666 = vunpack.c.h.b16 %v495
        %v667 = vunpack.c.l.b16 %v496
        %v668 = vunpack.c.h.b16 %v496
        %v669 = vunpack.c.l.b16 %v497
        %v670 = vunpack.c.h.b16 %v497
        %v671 = vunpack.c.l.b16 %v498
        %v672 = vunpack.c.h.b16 %v498
        %v673 = vunpack.c.l.b16 %v499
        %v674 = vunpack.c.h.b16 %v499
        %v675 = vunpack.c.l.b16 %v500
        %v676 = vunpack.c.h.b16 %v500
        %v677 = vunpack.c.l.b16 %v501
        %v678 = vunpack.c.h.b16 %v501
        %v679 = vunpack.c.l.b16 %v502
        %v680 = vunpack.c.h.b16 %v502
        %v681 = vunpack.c.l.b16 %v503
        %v682 = vunpack.c.h.b16 %v503
        %v683 = vunpack.c.l.b16 %v504
        %v684 = vunpack.c.h.b16 %v504
        %v685 = vunpack.c.l.b16 %v505
        %v686 = vunpack.c.h.b16 %v505
        %v687 = vunpack.c.l.b16 %v506
        %v688 = vunpack.c.h.b16 %v506
        %v689 = vunpack.c.l.b16 %v507
        %v690 = vunpack.c.h.b16 %v507
        %v691 = vunpack.c.l.b16 %v508
        %v692 = vunpack.c.h.b16 %v508
        %v693 = vunpack.c.l.b16 %v509
        %v694 = vunpack.c.h.b16 %v509
        %v695 = vunpack.c.l.b16 %v510
        %v696 = vunpack.c.h.b16 %v510
        %v697 = vunpack.c.l.b16 %v511
        %v698 = vunpack.c.h.b16 %v511
        %v699 = vunpack.c.l.b16 %v512
        %v700 = vunpack.c.h.b16 %v512
        %v701 = vunpack.c.l.b16 %v513
        %v702 = vunpack.c.h.b16 %v513
        %v703 = vunpack.c.l.b16 %v514
        %v704 = vunpack.c.h.b16 %v514
        %v705 = vunpack.c.l.b16 %v515
        %v706 = vunpack.c.h.b16 %v515
        %v707 = vunpack.c.l.b16 %v516
        %v708 = vunpack.c.h.b16 %v516
        %v709 = vunpack.c.l.b16 %v517
        %v710 = vunpack.c.h.b16 %v517
        %v711 = vunpack.c.l.b16 %v518
        %v712 = vunpack.c.h.b16 %v518
        %v713 = vunpack.c.l.b16 %v519
        %v714 = vunpack.c.h.b16 %v519
        %v715 = vunpack.c.l.b16 %v520
        %v716 = vunpack.c.h.b16 %v520
        %v717 = vunpack.c.l.b16 %v521
        %v718 = vunpack.c.h.b16 %v521
        %v719 = vunpack.c.l.b16 %v522
        %v720 = vunpack.c.h.b16 %v522
        %v721 = vunpack.c.l.b16 %v523
        %v722 = vunpack.c.h.b16 %v523
        %v723 = vunpack.c.l.b16 %v524
        %v724 = vunpack.c.h.b16 %v524
        %v725 = vunpack.c.l.b16 %v525
        %v726 = vunpack.c.h.b16 %v525
        %v727 = vunpack.c.l.b16 %v526
        %v728 = vunpack.c.h.b16 %v526
        %v729 = vunpack.c.l.b16 %v527
        %v730 = vunpack.c.h.b16 %v527
        %v731 = vunpack.c.l.b16 %v528
        %v732 = vunpack.c.h.b16 %v528
        %v733 = vunpack.c.l.b16 %v529
        %v734 = vunpack.c.h.b16 %v529
        %v735 = vunpack.c.l.b16 %v530
        %v736 = vunpack.c.h.b16 %v530
        %v737 = vunpack.c.l.b16 %v531
        %v738 = vunpack.c.h.b16 %v531
        %v739 = vunpack.c.l.b16 %v532
        %v740 = vunpack.c.h.b16 %v532
        %v741 = vunpack.c.l.b16 %v533
        %v742 = vunpack.c.h.b16 %v533
        %v743 = vunpack.c.l.b16 %v534
        %v744 = vunpack.c.h.b16 %v534
        %v745 = vunpack.c.l.b16 %v535
        %v746 = vunpack.c.h.b16 %v535
        %v747 = vunpack.c.l.b16 %v536
        %v748 = vunpack.c.h.b16 %v536
        %v749 = vunpack.c.l.b16 %v537
        %v750 = vunpack.c.h.b16 %v537
        %v751 = vunpack.c.l.b16 %v538
        %v752 = vunpack.c.h.b16 %v538
        %v753 = vunpack.c.l.b16 %v539
        %v754 = vunpack.c.h.b16 %v539
        %v755 = vunpack.c.l.b16 %v540
        %v756 = vunpack.c.h.b16 %v540
        %v757 = vunpack.c.l.b16 %v541
        %v758 = vunpack.c.h.b16 %v541
        %v759 = vunpack.c.l.b16 %v542
        %v760 = vunpack.c.h.b16 %v542
        %v761 = vunpack.c.l.b16 %v543
        %v762 = vunpack.c.h.b16 %v543
        %v763 = vunpack.c.l.b16 %v544
        %v764 = vunpack.c.h.b16 %v544
        %v765 = vunpack.c.l.b16 %v545
        %v766 = vunpack.c.h.b16 %v545
        %v767 = vunpack.c.l.b16 %v546
        %v768 = vunpack.c.h.b16 %v546
        %v769 = vunpack.c.l.b16 %v547
        %v770 = vunpack.c.h.b16 %v547
        %v771 = vunpack.c.l.b16 %v548
        %v772 = vunpack.c.h.b16 %v548
        %v773 = vunpack.c.l.b16 %v549
        %v774 = vunpack.c.h.b16 %v549
        %v775 = vunpack.c.l.b16 %v550
        %v776 = vunpack.c.h.b16 %v550
        %v777 = vunpack.c.l.b16 %v551
        %v778 = vunpack.c.h.b16 %v551
        %v779 = vunpack.c.l.b16 %v552
        %v780 = vunpack.c.h.b16 %v552
        %v781 = vunpack.c.l.b16 %v553
        %v782 = vunpack.c.h.b16 %v553
        %v783 = vunpack.c.l.b16 %v554
        %v784 = vunpack.c.h.b16 %v554
        %v785 = vunpack.c.l.b16 %v555
        %v786 = vunpack.c.h.b16 %v555
        %v787 = vunpack.c.l.b16 %v556
        %v788 = vunpack.c.h.b16 %v556
        %v789 = vunpack.c.l.b16 %v557
        %v790 = vunpack.c.h.b16 %v557
        %v791 = vunpack.c.l.b16 %v558
        %v792 = vunpack.c.h.b16 %v558
        %v793 = vpack.c.b16 %v673, %v665
        %v794 = vpack.c.b16 %v674, %v666
        %v795 = vpack.c.b16 %v675, %v667
        %v796 = vpack.c.b16 %v676, %v668
        %v797 = vpack.c.b16 %v677, %v669
        %v798 = vpack.c.b16 %v678, %v670
        %v799 = vpack.c.b16 %v679, %v671
        %v800 = vpack.c.b16 %v680, %v672
        %v801 = vpack.c.b16 %v689, %v681
        %v802 = vpack.c.b16 %v690, %v682
        %v803 = vpack.c.b16 %v691, %v683
        %v804 = vpack.c.b16 %v692, %v684
        %v805 = vpack.c.b16 %v693, %v685
        %v806 = vpack.c.b16 %v694, %v686
        %v807 = vpack.c.b16 %v695, %v687
        %v808 = vpack.c.b16 %v696, %v688
        %v809 = vpack.c.b16 %v705, %v697
        %v810 = vpack.c.b16 %v706, %v698
        %v811 = vpack.c.b16 %v707, %v699
        %v812 = vpack.c.b16 %v708, %v700
        %v813 = vpack.c.b16 %v709, %v701
        %v814 = vpack.c.b16 %v710, %v702
        %v815 = vpack.c.b16 %v711, %v703
        %v816 = vpack.c.b16 %v712, %v704
        %v817 = vpack.c.b16 %v721, %v713
        %v818 = vpack.c.b16 %v722, %v714
        %v819 = vpack.c.b16 %v723, %v715
        %v820 = vpack.c.b16 %v724, %v716
        %v821 = vpack.c.b16 %v725, %v717
        %v822 = vpack.c.b16 %v726, %v718
        %v823 = vpack.c.b16 %v727, %v719
        %v824 = vpack.c.b16 %v728, %v720
        %v825 = vpack.c.b16 %v737, %v729
        %v826 = vpack.c.b16 %v738, %v730
        %v827 = vpack.c.b16 %v739, %v731
        %v828 = vpack.c.b16 %v740, %v732
        %v829 = vpack.c.b16 %v741, %v733
        %v830 = vpack.c.b16 %v742, %v734
        %v831 = vpack.c.b16 %v743, %v735
        %v832 = vpack.c.b16 %v744, %v736
        %v833 = vpack.c.b16 %v753, %v745
        %v834 = vpack.c.b16 %v754, %v746
        %v835 = vpack.c.b16 %v755, %v747
        %v836 = vpack.c.b16 %v756, %v748
        %v837 = vpack.c.b16 %v757, %v749
        %v838 = vpack.c.b16 %v758, %v750
        %v839 = vpack.c.b16 %v759, %v751
        %v840 = vpack.c.b16 %v760, %v752
        %v841 = vpack.c.b16 %v769, %v761
        %v842 = vpack.c.b16 %v770, %v762
        %v843 = vpack.c.b16 %v771, %v763
        %v844 = vpack.c.b16 %v772, %v764
        %v845 = vpack.c.b16 %v773, %v765
        %v846 = vpack.c.b16 %v774, %v766
        %v847 = vpack.c.b16 %v775, %v767
        %v848 = vpack.c.b16 %v776, %v768
        %v849 = vpack.c.b16 %v785, %v777
        %v850 = vpack.c.b16 %v786, %v778
        %v851 = vpack.c.b16 %v787, %v779
        %v852 = vpack.c.b16 %v788, %v780
        %v853 = vpack.c.b16 %v789, %v781
        %v854 = vpack.c.b16 %v790, %v782
        %v855 = vpack.c.b16 %v791, %v783
        %v856 = vpack.c.b16 %v792, %v784
        %921 = vmatprep.subr.bf16.mxu0 %v794
        %922 = vmatpush1.bf16.msra.mxu0 %v793
        %923 = vmatprep.subr.bf16.mxu0 %v802
        %924 = vmatpush1.bf16.msra.mxu0 %v801
        %925 = vmatprep.subr.bf16.mxu0 %v810
        %926 = vmatpush1.bf16.msra.mxu0 %v809
        %927 = vmatprep.subr.bf16.mxu0 %v818
        %928 = vmatpush1.bf16.msra.mxu0 %v817
        %929 = vmatprep.subr.bf16.mxu0 %v826
        %930 = vmatpush1.bf16.msra.mxu0 %v825
        %931 = vmatprep.subr.bf16.mxu0 %v834
        %932 = vmatpush1.bf16.msra.mxu0 %v833
        %933 = vmatprep.subr.bf16.mxu0 %v842
        %934 = vmatpush1.bf16.msra.mxu0 %v841
        %935 = vmatprep.subr.bf16.mxu0 %v850
        %936 = vmatpush1.bf16.msra.mxu0 %v849
        %937 = vmatprep.subr.bf16.mxu0 0
        %938 = vmatpush1.bf16.msra.mxu0 0
        %939 = vmatprep.subr.bf16.mxu0 0
        %940 = vmatpush1.bf16.msra.mxu0 0
        %941 = vmatprep.subr.bf16.mxu0 0
        %942 = vmatpush1.bf16.msra.mxu0 0
        %943 = vmatprep.subr.bf16.mxu0 0
        %944 = vmatpush1.bf16.msra.mxu0 0
        %945 = vmatprep.subr.bf16.mxu0 0
        %946 = vmatpush1.bf16.msra.mxu0 0
        %947 = vmatprep.subr.bf16.mxu0 0
        %948 = vmatpush1.bf16.msra.mxu0 0
        %949 = vmatprep.subr.bf16.mxu0 0
        %950 = vmatpush1.bf16.msra.mxu0 0
        %951 = vmatprep.subr.bf16.mxu0 0
        %952 = vmatpush1.bf16.msra.mxu0 0
        %953 = vmatprep.mubr.bf16.mxu0 0
        %954 = vmatmul.mubr.bf16.gmra.mrb[0].mxu0 %v487
        %v955 = vpop.f32.mrb[0].mxu0
        %v956 = vadd.f32 %v564, %v955
        %v957 = vpop.f32.mrb[0].mxu0
        %v958 = vadd.f32 %v568, %v957
        %v959 = vpop.f32.mrb[0].mxu0
        %v960 = vadd.f32 %v564, %v959
        %v961 = vpop.f32.mrb[0].mxu0
        %v962 = vadd.f32 %v568, %v961
        %963 = vmatprep.mubr.bf16.mxu0 0
        %964 = vmatmul.mubr.bf16.gmra.mrb[0].mxu0 %v488
        %v965 = vpop.f32.mrb[0].mxu0
        %v966 = vadd.f32 %v564, %v965
        %v967 = vpop.f32.mrb[0].mxu0
        %v968 = vadd.f32 %v568, %v967
        %v969 = vpop.f32.mrb[0].mxu0
        %v970 = vadd.f32 %v564, %v969
        %v971 = vpop.f32.mrb[0].mxu0
        %v972 = vadd.f32 %v568, %v971
        %973 = vmatprep.mubr.bf16.mxu0 0
        %974 = vmatmul.mubr.bf16.gmra.mrb[0].mxu0 %v489
        %v975 = vpop.f32.mrb[0].mxu0
        %v976 = vadd.f32 %v564, %v975
        %v977 = vpop.f32.mrb[0].mxu0
        %v978 = vadd.f32 %v568, %v977
        %v979 = vpop.f32.mrb[0].mxu0
        %v980 = vadd.f32 %v564, %v979
        %v981 = vpop.f32.mrb[0].mxu0
        %v982 = vadd.f32 %v568, %v981
        %983 = vmatprep.mubr.bf16.mxu0 0
        %984 = vmatmul.mubr.bf16.gmra.mrb[0].mxu0 %v490
        %v985 = vpop.f32.mrb[0].mxu0
        %v986 = vadd.f32 %v564, %v985
        %v987 = vpop.f32.mrb[0].mxu0
        %v988 = vadd.f32 %v568, %v987
        %v989 = vpop.f32.mrb[0].mxu0
        %v990 = vadd.f32 %v564, %v989
        %v991 = vpop.f32.mrb[0].mxu0
        %v992 = vadd.f32 %v568, %v991
        %993 = vmatprep.mubr.bf16.mxu0 0
        %994 = vmatmul.mubr.bf16.gmra.mrb[0].mxu0 %v491
        %v995 = vpop.f32.mrb[0].mxu0
        %v996 = vadd.f32 %v564, %v995
        %v997 = vpop.f32.mrb[0].mxu0
        %v998 = vadd.f32 %v568, %v997
        %v999 = vpop.f32.mrb[0].mxu0
        %v1000 = vadd.f32 %v564, %v999
        %v1001 = vpop.f32.mrb[0].mxu0
        %v1002 = vadd.f32 %v568, %v1001
        %1003 = vmatprep.mubr.bf16.mxu0 0
        %1004 = vmatmul.mubr.bf16.gmra.mrb[0].mxu0 %v492
        %v1005 = vpop.f32.mrb[0].mxu0
        %v1006 = vadd.f32 %v564, %v1005
        %v1007 = vpop.f32.mrb[0].mxu0
        %v1008 = vadd.f32 %v568, %v1007
        %v1009 = vpop.f32.mrb[0].mxu0
        %v1010 = vadd.f32 %v564, %v1009
        %v1011 = vpop.f32.mrb[0].mxu0
        %v1012 = vadd.f32 %v568, %v1011
        %1013 = vmatprep.mubr.bf16.mxu0 0
        %1014 = vmatmul.mubr.bf16.gmra.mrb[0].mxu0 %v493
        %v1015 = vpop.f32.mrb[0].mxu0
        %v1016 = vadd.f32 %v564, %v1015
        %v1017 = vpop.f32.mrb[0].mxu0
        %v1018 = vadd.f32 %v568, %v1017
        %v1019 = vpop.f32.mrb[0].mxu0
        %v1020 = vadd.f32 %v564, %v1019
        %v1021 = vpop.f32.mrb[0].mxu0
        %v1022 = vadd.f32 %v568, %v1021
        %1023 = vmatprep.mubr.bf16.mxu0 0
        %1024 = vmatmul.mubr.bf16.gmra.mrb[0].mxu0 %v494
        %v1025 = vpop.f32.mrb[0].mxu0
        %v1026 = vadd.f32 %v564, %v1025
        %v1027 = vpop.f32.mrb[0].mxu0
        %v1028 = vadd.f32 %v568, %v1027
        %v1029 = vpop.f32.mrb[0].mxu0
        %v1030 = vadd.f32 %v564, %v1029
        %v1031 = vpop.f32.mrb[0].mxu0
        %v1032 = vadd.f32 %v568, %v1031
        %1033 = vdwg.mxu0
        %1034 = vmatprep.subr.bf16.mxu0 %v796
        %1035 = vmatpush1.bf16.msra.mxu0 %v795
        %1036 = vmatprep.subr.bf16.mxu0 %v804
        %1037 = vmatpush1.bf16.msra.mxu0 %v803
        %1038 = vmatprep.subr.bf16.mxu0 %v812
        %1039 = vmatpush1.bf16.msra.mxu0 %v811
        %1040 = vmatprep.subr.bf16.mxu0 %v820
        %1041 = vmatpush1.bf16.msra.mxu0 %v819
        %1042 = vmatprep.subr.bf16.mxu0 %v828
        %1043 = vmatpush1.bf16.msra.mxu0 %v827
        %1044 = vmatprep.subr.bf16.mxu0 %v836
        %1045 = vmatpush1.bf16.msra.mxu0 %v835
        %1046 = vmatprep.subr.bf16.mxu0 %v844
        %1047 = vmatpush1.bf16.msra.mxu0 %v843
        %1048 = vmatprep.subr.bf16.mxu0 %v852
        %1049 = vmatpush1.bf16.msra.mxu0 %v851
        %1050 = vmatprep.subr.bf16.mxu0 0
        %1051 = vmatpush1.bf16.msra.mxu0 0
        %1052 = vmatprep.subr.bf16.mxu0 0
        %1053 = vmatpush1.bf16.msra.mxu0 0
        %1054 = vmatprep.subr.bf16.mxu0 0
        %1055 = vmatpush1.bf16.msra.mxu0 0
        %1056 = vmatprep.subr.bf16.mxu0 0
        %1057 = vmatpush1.bf16.msra.mxu0 0
        %1058 = vmatprep.subr.bf16.mxu0 0
        %1059 = vmatpush1.bf16.msra.mxu0 0
        %1060 = vmatprep.subr.bf16.mxu0 0
        %1061 = vmatpush1.bf16.msra.mxu0 0
        %1062 = vmatprep.subr.bf16.mxu0 0
        %1063 = vmatpush1.bf16.msra.mxu0 0
        %1064 = vmatprep.subr.bf16.mxu0 0
        %1065 = vmatpush1.bf16.msra.mxu0 0
        %1066 = vmatprep.mubr.bf16.mxu0 0
        %1067 = vmatmul.mubr.bf16.gmra.mrb[0].mxu0 %v487
        %v1068 = vpop.f32.mrb[0].mxu0
        %v1069 = vadd.f32 %v572, %v1068
        %v1070 = vpop.f32.mrb[0].mxu0
        %v1071 = vadd.f32 %v576, %v1070
        %v1072 = vpop.f32.mrb[0].mxu0
        %v1073 = vadd.f32 %v572, %v1072
        %v1074 = vpop.f32.mrb[0].mxu0
        %v1075 = vadd.f32 %v576, %v1074
        %1076 = vmatprep.mubr.bf16.mxu0 0
        %1077 = vmatmul.mubr.bf16.gmra.mrb[0].mxu0 %v488
        %v1078 = vpop.f32.mrb[0].mxu0
        %v1079 = vadd.f32 %v572, %v1078
        %v1080 = vpop.f32.mrb[0].mxu0
        %v1081 = vadd.f32 %v576, %v1080
        %v1082 = vpop.f32.mrb[0].mxu0
        %v1083 = vadd.f32 %v572, %v1082
        %v1084 = vpop.f32.mrb[0].mxu0
        %v1085 = vadd.f32 %v576, %v1084
        %1086 = vmatprep.mubr.bf16.mxu0 0
        %1087 = vmatmul.mubr.bf16.gmra.mrb[0].mxu0 %v489
        %v1088 = vpop.f32.mrb[0].mxu0
        %v1089 = vadd.f32 %v572, %v1088
        %v1090 = vpop.f32.mrb[0].mxu0
        %v1091 = vadd.f32 %v576, %v1090
        %v1092 = vpop.f32.mrb[0].mxu0
        %v1093 = vadd.f32 %v572, %v1092
        %v1094 = vpop.f32.mrb[0].mxu0
        %v1095 = vadd.f32 %v576, %v1094
        %1096 = vmatprep.mubr.bf16.mxu0 0
        %1097 = vmatmul.mubr.bf16.gmra.mrb[0].mxu0 %v490
        %v1098 = vpop.f32.mrb[0].mxu0
        %v1099 = vadd.f32 %v572, %v1098
        %v1100 = vpop.f32.mrb[0].mxu0
        %v1101 = vadd.f32 %v576, %v1100
        %v1102 = vpop.f32.mrb[0].mxu0
        %v1103 = vadd.f32 %v572, %v1102
        %v1104 = vpop.f32.mrb[0].mxu0
        %v1105 = vadd.f32 %v576, %v1104
        %1106 = vmatprep.mubr.bf16.mxu0 0
        %1107 = vmatmul.mubr.bf16.gmra.mrb[0].mxu0 %v491
        %v1108 = vpop.f32.mrb[0].mxu0
        %v1109 = vadd.f32 %v572, %v1108
        %v1110 = vpop.f32.mrb[0].mxu0
        %v1111 = vadd.f32 %v576, %v1110
        %v1112 = vpop.f32.mrb[0].mxu0
        %v1113 = vadd.f32 %v572, %v1112
        %v1114 = vpop.f32.mrb[0].mxu0
        %v1115 = vadd.f32 %v576, %v1114
        %1116 = vmatprep.mubr.bf16.mxu0 0
        %1117 = vmatmul.mubr.bf16.gmra.mrb[0].mxu0 %v492
        %v1118 = vpop.f32.mrb[0].mxu0
        %v1119 = vadd.f32 %v572, %v1118
        %v1120 = vpop.f32.mrb[0].mxu0
        %v1121 = vadd.f32 %v576, %v1120
        %v1122 = vpop.f32.mrb[0].mxu0
        %v1123 = vadd.f32 %v572, %v1122
        %v1124 = vpop.f32.mrb[0].mxu0
        %v1125 = vadd.f32 %v576, %v1124
        %1126 = vmatprep.mubr.bf16.mxu0 0
        %1127 = vmatmul.mubr.bf16.gmra.mrb[0].mxu0 %v493
        %v1128 = vpop.f32.mrb[0].mxu0
        %v1129 = vadd.f32 %v572, %v1128
        %v1130 = vpop.f32.mrb[0].mxu0
        %v1131 = vadd.f32 %v576, %v1130
        %v1132 = vpop.f32.mrb[0].mxu0
        %v1133 = vadd.f32 %v572, %v1132
        %v1134 = vpop.f32.mrb[0].mxu0
        %v1135 = vadd.f32 %v576, %v1134
        %1136 = vmatprep.mubr.bf16.mxu0 0
        %1137 = vmatmul.mubr.bf16.gmra.mrb[0].mxu0 %v494
        %v1138 = vpop.f32.mrb[0].mxu0
        %v1139 = vadd.f32 %v572, %v1138
        %v1140 = vpop.f32.mrb[0].mxu0
        %v1141 = vadd.f32 %v576, %v1140
        %v1142 = vpop.f32.mrb[0].mxu0
        %v1143 = vadd.f32 %v572, %v1142
        %v1144 = vpop.f32.mrb[0].mxu0
        %v1145 = vadd.f32 %v576, %v1144
        %1146 = vdwg.mxu0
        %1147 = vmatprep.subr.bf16.mxu0 %v798
        %1148 = vmatpush1.bf16.msra.mxu0 %v797
        %1149 = vmatprep.subr.bf16.mxu0 %v806
        %1150 = vmatpush1.bf16.msra.mxu0 %v805
        %1151 = vmatprep.subr.bf16.mxu0 %v814
        %1152 = vmatpush1.bf16.msra.mxu0 %v813
        %1153 = vmatprep.subr.bf16.mxu0 %v822
        %1154 = vmatpush1.bf16.msra.mxu0 %v821
        %1155 = vmatprep.subr.bf16.mxu0 %v830
        %1156 = vmatpush1.bf16.msra.mxu0 %v829
        %1157 = vmatprep.subr.bf16.mxu0 %v838
        %1158 = vmatpush1.bf16.msra.mxu0 %v837
        %1159 = vmatprep.subr.bf16.mxu0 %v846
        %1160 = vmatpush1.bf16.msra.mxu0 %v845
        %1161 = vmatprep.subr.bf16.mxu0 %v854
        %1162 = vmatpush1.bf16.msra.mxu0 %v853
        %1163 = vmatprep.subr.bf16.mxu0 0
        %1164 = vmatpush1.bf16.msra.mxu0 0
        %1165 = vmatprep.subr.bf16.mxu0 0
        %1166 = vmatpush1.bf16.msra.mxu0 0
        %1167 = vmatprep.subr.bf16.mxu0 0
        %1168 = vmatpush1.bf16.msra.mxu0 0
        %1169 = vmatprep.subr.bf16.mxu0 0
        %1170 = vmatpush1.bf16.msra.mxu0 0
        %1171 = vmatprep.subr.bf16.mxu0 0
        %1172 = vmatpush1.bf16.msra.mxu0 0
        %1173 = vmatprep.subr.bf16.mxu0 0
        %1174 = vmatpush1.bf16.msra.mxu0 0
        %1175 = vmatprep.subr.bf16.mxu0 0
        %1176 = vmatpush1.bf16.msra.mxu0 0
        %1177 = vmatprep.subr.bf16.mxu0 0
        %1178 = vmatpush1.bf16.msra.mxu0 0
        %1179 = vmatprep.mubr.bf16.mxu0 0
        %1180 = vmatmul.mubr.bf16.gmra.mrb[0].mxu0 %v487
        %v1181 = vpop.f32.mrb[0].mxu0
        %v1182 = vadd.f32 %v580, %v1181
        %v1183 = vpop.f32.mrb[0].mxu0
        %v1184 = vadd.f32 %v584, %v1183
        %v1185 = vpop.f32.mrb[0].mxu0
        %v1186 = vadd.f32 %v580, %v1185
        %v1187 = vpop.f32.mrb[0].mxu0
        %v1188 = vadd.f32 %v584, %v1187
        %1189 = vmatprep.mubr.bf16.mxu0 0
        %1190 = vmatmul.mubr.bf16.gmra.mrb[0].mxu0 %v488
        %v1191 = vpop.f32.mrb[0].mxu0
        %v1192 = vadd.f32 %v580, %v1191
        %v1193 = vpop.f32.mrb[0].mxu0
        %v1194 = vadd.f32 %v584, %v1193
        %v1195 = vpop.f32.mrb[0].mxu0
        %v1196 = vadd.f32 %v580, %v1195
        %v1197 = vpop.f32.mrb[0].mxu0
        %v1198 = vadd.f32 %v584, %v1197
        %1199 = vmatprep.mubr.bf16.mxu0 0
        %1200 = vmatmul.mubr.bf16.gmra.mrb[0].mxu0 %v489
        %v1201 = vpop.f32.mrb[0].mxu0
        %v1202 = vadd.f32 %v580, %v1201
        %v1203 = vpop.f32.mrb[0].mxu0
        %v1204 = vadd.f32 %v584, %v1203
        %v1205 = vpop.f32.mrb[0].mxu0
        %v1206 = vadd.f32 %v580, %v1205
        %v1207 = vpop.f32.mrb[0].mxu0
        %v1208 = vadd.f32 %v584, %v1207
        %1209 = vmatprep.mubr.bf16.mxu0 0
        %1210 = vmatmul.mubr.bf16.gmra.mrb[0].mxu0 %v490
        %v1211 = vpop.f32.mrb[0].mxu0
        %v1212 = vadd.f32 %v580, %v1211
        %v1213 = vpop.f32.mrb[0].mxu0
        %v1214 = vadd.f32 %v584, %v1213
        %v1215 = vpop.f32.mrb[0].mxu0
        %v1216 = vadd.f32 %v580, %v1215
        %v1217 = vpop.f32.mrb[0].mxu0
        %v1218 = vadd.f32 %v584, %v1217
        %1219 = vmatprep.mubr.bf16.mxu0 0
        %1220 = vmatmul.mubr.bf16.gmra.mrb[0].mxu0 %v491
        %v1221 = vpop.f32.mrb[0].mxu0
        %v1222 = vadd.f32 %v580, %v1221
        %v1223 = vpop.f32.mrb[0].mxu0
        %v1224 = vadd.f32 %v584, %v1223
        %v1225 = vpop.f32.mrb[0].mxu0
        %v1226 = vadd.f32 %v580, %v1225
        %v1227 = vpop.f32.mrb[0].mxu0
        %v1228 = vadd.f32 %v584, %v1227
        %1229 = vmatprep.mubr.bf16.mxu0 0
        %1230 = vmatmul.mubr.bf16.gmra.mrb[0].mxu0 %v492
        %v1231 = vpop.f32.mrb[0].mxu0
        %v1232 = vadd.f32 %v580, %v1231
        %v1233 = vpop.f32.mrb[0].mxu0
        %v1234 = vadd.f32 %v584, %v1233
        %v1235 = vpop.f32.mrb[0].mxu0
        %v1236 = vadd.f32 %v580, %v1235
        %v1237 = vpop.f32.mrb[0].mxu0
        %v1238 = vadd.f32 %v584, %v1237
        %1239 = vmatprep.mubr.bf16.mxu0 0
        %1240 = vmatmul.mubr.bf16.gmra.mrb[0].mxu0 %v493
        %v1241 = vpop.f32.mrb[0].mxu0
        %v1242 = vadd.f32 %v580, %v1241
        %v1243 = vpop.f32.mrb[0].mxu0
        %v1244 = vadd.f32 %v584, %v1243
        %v1245 = vpop.f32.mrb[0].mxu0
        %v1246 = vadd.f32 %v580, %v1245
        %v1247 = vpop.f32.mrb[0].mxu0
        %v1248 = vadd.f32 %v584, %v1247
        %1249 = vmatprep.mubr.bf16.mxu0 0
        %1250 = vmatmul.mubr.bf16.gmra.mrb[0].mxu0 %v494
        %v1251 = vpop.f32.mrb[0].mxu0
        %v1252 = vadd.f32 %v580, %v1251
        %v1253 = vpop.f32.mrb[0].mxu0
        %v1254 = vadd.f32 %v584, %v1253
        %v1255 = vpop.f32.mrb[0].mxu0
        %v1256 = vadd.f32 %v580, %v1255
        %v1257 = vpop.f32.mrb[0].mxu0
        %v1258 = vadd.f32 %v584, %v1257
        %1259 = vdwg.mxu0
        %1260 = vmatprep.subr.bf16.mxu0 %v800
        %1261 = vmatpush1.bf16.msra.mxu0 %v799
        %1262 = vmatprep.subr.bf16.mxu0 %v808
        %1263 = vmatpush1.bf16.msra.mxu0 %v807
        %1264 = vmatprep.subr.bf16.mxu0 %v816
        %1265 = vmatpush1.bf16.msra.mxu0 %v815
        %1266 = vmatprep.subr.bf16.mxu0 %v824
        %1267 = vmatpush1.bf16.msra.mxu0 %v823
        %1268 = vmatprep.subr.bf16.mxu0 %v832
        %1269 = vmatpush1.bf16.msra.mxu0 %v831
        %1270 = vmatprep.subr.bf16.mxu0 %v840
        %1271 = vmatpush1.bf16.msra.mxu0 %v839
        %1272 = vmatprep.subr.bf16.mxu0 %v848
        %1273 = vmatpush1.bf16.msra.mxu0 %v847
        %1274 = vmatprep.subr.bf16.mxu0 %v856
        %1275 = vmatpush1.bf16.msra.mxu0 %v855
        %1276 = vmatprep.subr.bf16.mxu0 0
        %1277 = vmatpush1.bf16.msra.mxu0 0
        %1278 = vmatprep.subr.bf16.mxu0 0
        %1279 = vmatpush1.bf16.msra.mxu0 0
        %1280 = vmatprep.subr.bf16.mxu0 0
        %1281 = vmatpush1.bf16.msra.mxu0 0
        %1282 = vmatprep.subr.bf16.mxu0 0
        %1283 = vmatpush1.bf16.msra.mxu0 0
        %1284 = vmatprep.subr.bf16.mxu0 0
        %1285 = vmatpush1.bf16.msra.mxu0 0
        %1286 = vmatprep.subr.bf16.mxu0 0
        %1287 = vmatpush1.bf16.msra.mxu0 0
        %1288 = vmatprep.subr.bf16.mxu0 0
        %1289 = vmatpush1.bf16.msra.mxu0 0
        %1290 = vmatprep.subr.bf16.mxu0 0
        %1291 = vmatpush1.bf16.msra.mxu0 0
        %1292 = vmatprep.mubr.bf16.mxu0 0
        %1293 = vmatmul.mubr.bf16.gmra.mrb[0].mxu0 %v487
        %v1294 = vpop.f32.mrb[0].mxu0
        %v1295 = vadd.f32 %v588, %v1294
        %v1296 = vpop.f32.mrb[0].mxu0
        %v1297 = vadd.f32 %v592, %v1296
        %v1298 = vpop.f32.mrb[0].mxu0
        %v1299 = vadd.f32 %v588, %v1298
        %v1300 = vpop.f32.mrb[0].mxu0
        %v1301 = vadd.f32 %v592, %v1300
        %1302 = vmatprep.mubr.bf16.mxu0 0
        %1303 = vmatmul.mubr.bf16.gmra.mrb[0].mxu0 %v488
        %v1304 = vpop.f32.mrb[0].mxu0
        %v1305 = vadd.f32 %v588, %v1304
        %v1306 = vpop.f32.mrb[0].mxu0
        %v1307 = vadd.f32 %v592, %v1306
        %v1308 = vpop.f32.mrb[0].mxu0
        %v1309 = vadd.f32 %v588, %v1308
        %v1310 = vpop.f32.mrb[0].mxu0
        %v1311 = vadd.f32 %v592, %v1310
        %1312 = vmatprep.mubr.bf16.mxu0 0
        %1313 = vmatmul.mubr.bf16.gmra.mrb[0].mxu0 %v489
        %v1314 = vpop.f32.mrb[0].mxu0
        %v1315 = vadd.f32 %v588, %v1314
        %v1316 = vpop.f32.mrb[0].mxu0
        %v1317 = vadd.f32 %v592, %v1316
        %v1318 = vpop.f32.mrb[0].mxu0
        %v1319 = vadd.f32 %v588, %v1318
        %v1320 = vpop.f32.mrb[0].mxu0
        %v1321 = vadd.f32 %v592, %v1320
        %1322 = vmatprep.mubr.bf16.mxu0 0
        %1323 = vmatmul.mubr.bf16.gmra.mrb[0].mxu0 %v490
        %v1324 = vpop.f32.mrb[0].mxu0
        %v1325 = vadd.f32 %v588, %v1324
        %v1326 = vpop.f32.mrb[0].mxu0
        %v1327 = vadd.f32 %v592, %v1326
        %v1328 = vpop.f32.mrb[0].mxu0
        %v1329 = vadd.f32 %v588, %v1328
        %v1330 = vpop.f32.mrb[0].mxu0
        %v1331 = vadd.f32 %v592, %v1330
        %1332 = vmatprep.mubr.bf16.mxu0 0
        %1333 = vmatmul.mubr.bf16.gmra.mrb[0].mxu0 %v491
        %v1334 = vpop.f32.mrb[0].mxu0
        %v1335 = vadd.f32 %v588, %v1334
        %v1336 = vpop.f32.mrb[0].mxu0
        %v1337 = vadd.f32 %v592, %v1336
        %v1338 = vpop.f32.mrb[0].mxu0
        %v1339 = vadd.f32 %v588, %v1338
        %v1340 = vpop.f32.mrb[0].mxu0
        %v1341 = vadd.f32 %v592, %v1340
        %1342 = vmatprep.mubr.bf16.mxu0 0
        %1343 = vmatmul.mubr.bf16.gmra.mrb[0].mxu0 %v492
        %v1344 = vpop.f32.mrb[0].mxu0
        %v1345 = vadd.f32 %v588, %v1344
        %v1346 = vpop.f32.mrb[0].mxu0
        %v1347 = vadd.f32 %v592, %v1346
        %v1348 = vpop.f32.mrb[0].mxu0
        %v1349 = vadd.f32 %v588, %v1348
        %v1350 = vpop.f32.mrb[0].mxu0
        %v1351 = vadd.f32 %v592, %v1350
        %1352 = vmatprep.mubr.bf16.mxu0 0
        %1353 = vmatmul.mubr.bf16.gmra.mrb[0].mxu0 %v493
        %v1354 = vpop.f32.mrb[0].mxu0
        %v1355 = vadd.f32 %v588, %v1354
        %v1356 = vpop.f32.mrb[0].mxu0
        %v1357 = vadd.f32 %v592, %v1356
        %v1358 = vpop.f32.mrb[0].mxu0
        %v1359 = vadd.f32 %v588, %v1358
        %v1360 = vpop.f32.mrb[0].mxu0
        %v1361 = vadd.f32 %v592, %v1360
        %1362 = vmatprep.mubr.bf16.mxu0 0
        %1363 = vmatmul.mubr.bf16.gmra.mrb[0].mxu0 %v494
        %v1364 = vpop.f32.mrb[0].mxu0
        %v1365 = vadd.f32 %v588, %v1364
        %v1366 = vpop.f32.mrb[0].mxu0
        %v1367 = vadd.f32 %v592, %v1366
        %v1368 = vpop.f32.mrb[0].mxu0
        %v1369 = vadd.f32 %v588, %v1368
        %v1370 = vpop.f32.mrb[0].mxu0
        %v1371 = vadd.f32 %v592, %v1370
        %1372 = vdwg.mxu0
        %v1373 = vxor.u32 %v956, 2147483648
        %v1374 = vxor.u32 %v958, 2147483648
        %v1375 = vxor.u32 %v1069, 2147483648
        %v1376 = vxor.u32 %v1071, 2147483648
        %v1377 = vxor.u32 %v1182, 2147483648
        %v1378 = vxor.u32 %v1184, 2147483648
        %v1379 = vxor.u32 %v1295, 2147483648
        %v1380 = vxor.u32 %v1297, 2147483648
        %v1381 = vxor.u32 %v960, 2147483648
        %v1382 = vxor.u32 %v962, 2147483648
        %v1383 = vxor.u32 %v1073, 2147483648
        %v1384 = vxor.u32 %v1075, 2147483648
        %v1385 = vxor.u32 %v1186, 2147483648
        %v1386 = vxor.u32 %v1188, 2147483648
        %v1387 = vxor.u32 %v1299, 2147483648
        %v1388 = vxor.u32 %v1301, 2147483648
        %v1389 = vxor.u32 %v966, 2147483648
        %v1390 = vxor.u32 %v968, 2147483648
        %v1391 = vxor.u32 %v1079, 2147483648
        %v1392 = vxor.u32 %v1081, 2147483648
        %v1393 = vxor.u32 %v1192, 2147483648
        %v1394 = vxor.u32 %v1194, 2147483648
        %v1395 = vxor.u32 %v1305, 2147483648
        %v1396 = vxor.u32 %v1307, 2147483648
        %v1397 = vxor.u32 %v970, 2147483648
        %v1398 = vxor.u32 %v972, 2147483648
        %v1399 = vxor.u32 %v1083, 2147483648
        %v1400 = vxor.u32 %v1085, 2147483648
        %v1401 = vxor.u32 %v1196, 2147483648
        %v1402 = vxor.u32 %v1198, 2147483648
        %v1403 = vxor.u32 %v1309, 2147483648
        %v1404 = vxor.u32 %v1311, 2147483648
        %v1405 = vxor.u32 %v976, 2147483648
        %v1406 = vxor.u32 %v978, 2147483648
        %v1407 = vxor.u32 %v1089, 2147483648
        %v1408 = vxor.u32 %v1091, 2147483648
        %v1409 = vxor.u32 %v1202, 2147483648
        %v1410 = vxor.u32 %v1204, 2147483648
        %v1411 = vxor.u32 %v1315, 2147483648
        %v1412 = vxor.u32 %v1317, 2147483648
        %v1413 = vxor.u32 %v980, 2147483648
        %v1414 = vxor.u32 %v982, 2147483648
        %v1415 = vxor.u32 %v1093, 2147483648
        %v1416 = vxor.u32 %v1095, 2147483648
        %v1417 = vxor.u32 %v1206, 2147483648
        %v1418 = vxor.u32 %v1208, 2147483648
        %v1419 = vxor.u32 %v1319, 2147483648
        %v1420 = vxor.u32 %v1321, 2147483648
        %v1421 = vxor.u32 %v986, 2147483648
        %v1422 = vxor.u32 %v988, 2147483648
        %v1423 = vxor.u32 %v1099, 2147483648
        %v1424 = vxor.u32 %v1101, 2147483648
        %v1425 = vxor.u32 %v1212, 2147483648
        %v1426 = vxor.u32 %v1214, 2147483648
        %v1427 = vxor.u32 %v1325, 2147483648
        %v1428 = vxor.u32 %v1327, 2147483648
        %v1429 = vxor.u32 %v990, 2147483648
        %v1430 = vxor.u32 %v992, 2147483648
        %v1431 = vxor.u32 %v1103, 2147483648
        %v1432 = vxor.u32 %v1105, 2147483648
        %v1433 = vxor.u32 %v1216, 2147483648
        %v1434 = vxor.u32 %v1218, 2147483648
        %v1435 = vxor.u32 %v1329, 2147483648
        %v1436 = vxor.u32 %v1331, 2147483648
        %v1437 = vxor.u32 %v996, 2147483648
        %v1438 = vxor.u32 %v998, 2147483648
        %v1439 = vxor.u32 %v1109, 2147483648
        %v1440 = vxor.u32 %v1111, 2147483648
        %v1441 = vxor.u32 %v1222, 2147483648
        %v1442 = vxor.u32 %v1224, 2147483648
        %v1443 = vxor.u32 %v1335, 2147483648
        %v1444 = vxor.u32 %v1337, 2147483648
        %v1445 = vxor.u32 %v1000, 2147483648
        %v1446 = vxor.u32 %v1002, 2147483648
        %v1447 = vxor.u32 %v1113, 2147483648
        %v1448 = vxor.u32 %v1115, 2147483648
        %v1449 = vxor.u32 %v1226, 2147483648
        %v1450 = vxor.u32 %v1228, 2147483648
        %v1451 = vxor.u32 %v1339, 2147483648
        %v1452 = vxor.u32 %v1341, 2147483648
        %v1453 = vxor.u32 %v1006, 2147483648
        %v1454 = vxor.u32 %v1008, 2147483648
        %v1455 = vxor.u32 %v1119, 2147483648
        %v1456 = vxor.u32 %v1121, 2147483648
        %v1457 = vxor.u32 %v1232, 2147483648
        %v1458 = vxor.u32 %v1234, 2147483648
        %v1459 = vxor.u32 %v1345, 2147483648
        %v1460 = vxor.u32 %v1347, 2147483648
        %v1461 = vxor.u32 %v1010, 2147483648
        %v1462 = vxor.u32 %v1012, 2147483648
        %v1463 = vxor.u32 %v1123, 2147483648
        %v1464 = vxor.u32 %v1125, 2147483648
        %v1465 = vxor.u32 %v1236, 2147483648
        %v1466 = vxor.u32 %v1238, 2147483648
        %v1467 = vxor.u32 %v1349, 2147483648
        %v1468 = vxor.u32 %v1351, 2147483648
        %v1469 = vxor.u32 %v1016, 2147483648
        %v1470 = vxor.u32 %v1018, 2147483648
        %v1471 = vxor.u32 %v1129, 2147483648
        %v1472 = vxor.u32 %v1131, 2147483648
        %v1473 = vxor.u32 %v1242, 2147483648
        %v1474 = vxor.u32 %v1244, 2147483648
        %v1475 = vxor.u32 %v1355, 2147483648
        %v1476 = vxor.u32 %v1357, 2147483648
        %v1477 = vxor.u32 %v1020, 2147483648
        %v1478 = vxor.u32 %v1022, 2147483648
        %v1479 = vxor.u32 %v1133, 2147483648
        %v1480 = vxor.u32 %v1135, 2147483648
        %v1481 = vxor.u32 %v1246, 2147483648
        %v1482 = vxor.u32 %v1248, 2147483648
        %v1483 = vxor.u32 %v1359, 2147483648
        %v1484 = vxor.u32 %v1361, 2147483648
        %v1485 = vxor.u32 %v1026, 2147483648
        %v1486 = vxor.u32 %v1028, 2147483648
        %v1487 = vxor.u32 %v1139, 2147483648
        %v1488 = vxor.u32 %v1141, 2147483648
        %v1489 = vxor.u32 %v1252, 2147483648
        %v1490 = vxor.u32 %v1254, 2147483648
        %v1491 = vxor.u32 %v1365, 2147483648
        %v1492 = vxor.u32 %v1367, 2147483648
        %v1493 = vxor.u32 %v1030, 2147483648
        %v1494 = vxor.u32 %v1032, 2147483648
        %v1495 = vxor.u32 %v1143, 2147483648
        %v1496 = vxor.u32 %v1145, 2147483648
        %v1497 = vxor.u32 %v1256, 2147483648
        %v1498 = vxor.u32 %v1258, 2147483648
        %v1499 = vxor.u32 %v1369, 2147483648
        %v1500 = vxor.u32 %v1371, 2147483648
        %v1501 = vmul.f32 %v1373, 1.442695
        %v1502 = vpow.pop %v1501
        %v1503 = vmul.f32 %v1374, 1.442695
        %v1504 = vpow.pop %v1503
        %v1505 = vmul.f32 %v1375, 1.442695
        %v1506 = vpow.pop %v1505
        %v1507 = vmul.f32 %v1376, 1.442695
        %v1508 = vpow.pop %v1507
        %v1509 = vmul.f32 %v1377, 1.442695
        %v1510 = vpow.pop %v1509
        %v1511 = vmul.f32 %v1378, 1.442695
        %v1512 = vpow.pop %v1511
        %v1513 = vmul.f32 %v1379, 1.442695
        %v1514 = vpow.pop %v1513
        %v1515 = vmul.f32 %v1380, 1.442695
        %v1516 = vpow.pop %v1515
        %v1517 = vmul.f32 %v1381, 1.442695
        %v1518 = vpow.pop %v1517
        %v1519 = vmul.f32 %v1382, 1.442695
        %v1520 = vpow.pop %v1519
        %v1521 = vmul.f32 %v1383, 1.442695
        %v1522 = vpow.pop %v1521
        %v1523 = vmul.f32 %v1384, 1.442695
        %v1524 = vpow.pop %v1523
        %v1525 = vmul.f32 %v1385, 1.442695
        %v1526 = vpow.pop %v1525
        %v1527 = vmul.f32 %v1386, 1.442695
        %v1528 = vpow.pop %v1527
        %v1529 = vmul.f32 %v1387, 1.442695
        %v1530 = vpow.pop %v1529
        %v1531 = vmul.f32 %v1388, 1.442695
        %v1532 = vpow.pop %v1531
        %v1533 = vmul.f32 %v1389, 1.442695
        %v1534 = vpow.pop %v1533
        %v1535 = vmul.f32 %v1390, 1.442695
        %v1536 = vpow.pop %v1535
        %v1537 = vmul.f32 %v1391, 1.442695
        %v1538 = vpow.pop %v1537
        %v1539 = vmul.f32 %v1392, 1.442695
        %v1540 = vpow.pop %v1539
        %v1541 = vmul.f32 %v1393, 1.442695
        %v1542 = vpow.pop %v1541
        %v1543 = vmul.f32 %v1394, 1.442695
        %v1544 = vpow.pop %v1543
        %v1545 = vmul.f32 %v1395, 1.442695
        %v1546 = vpow.pop %v1545
        %v1547 = vmul.f32 %v1396, 1.442695
        %v1548 = vpow.pop %v1547
        %v1549 = vmul.f32 %v1397, 1.442695
        %v1550 = vpow.pop %v1549
        %v1551 = vmul.f32 %v1398, 1.442695
        %v1552 = vpow.pop %v1551
        %v1553 = vmul.f32 %v1399, 1.442695
        %v1554 = vpow.pop %v1553
        %v1555 = vmul.f32 %v1400, 1.442695
        %v1556 = vpow.pop %v1555
        %v1557 = vmul.f32 %v1401, 1.442695
        %v1558 = vpow.pop %v1557
        %v1559 = vmul.f32 %v1402, 1.442695
        %v1560 = vpow.pop %v1559
        %v1561 = vmul.f32 %v1403, 1.442695
        %v1562 = vpow.pop %v1561
        %v1563 = vmul.f32 %v1404, 1.442695
        %v1564 = vpow.pop %v1563
        %v1565 = vmul.f32 %v1405, 1.442695
        %v1566 = vpow.pop %v1565
        %v1567 = vmul.f32 %v1406, 1.442695
        %v1568 = vpow.pop %v1567
        %v1569 = vmul.f32 %v1407, 1.442695
        %v1570 = vpow.pop %v1569
        %v1571 = vmul.f32 %v1408, 1.442695
        %v1572 = vpow.pop %v1571
        %v1573 = vmul.f32 %v1409, 1.442695
        %v1574 = vpow.pop %v1573
        %v1575 = vmul.f32 %v1410, 1.442695
        %v1576 = vpow.pop %v1575
        %v1577 = vmul.f32 %v1411, 1.442695
        %v1578 = vpow.pop %v1577
        %v1579 = vmul.f32 %v1412, 1.442695
        %v1580 = vpow.pop %v1579
        %v1581 = vmul.f32 %v1413, 1.442695
        %v1582 = vpow.pop %v1581
        %v1583 = vmul.f32 %v1414, 1.442695
        %v1584 = vpow.pop %v1583
        %v1585 = vmul.f32 %v1415, 1.442695
        %v1586 = vpow.pop %v1585
        %v1587 = vmul.f32 %v1416, 1.442695
        %v1588 = vpow.pop %v1587
        %v1589 = vmul.f32 %v1417, 1.442695
        %v1590 = vpow.pop %v1589
        %v1591 = vmul.f32 %v1418, 1.442695
        %v1592 = vpow.pop %v1591
        %v1593 = vmul.f32 %v1419, 1.442695
        %v1594 = vpow.pop %v1593
        %v1595 = vmul.f32 %v1420, 1.442695
        %v1596 = vpow.pop %v1595
        %v1597 = vmul.f32 %v1421, 1.442695
        %v1598 = vpow.pop %v1597
        %v1599 = vmul.f32 %v1422, 1.442695
        %v1600 = vpow.pop %v1599
        %v1601 = vmul.f32 %v1423, 1.442695
        %v1602 = vpow.pop %v1601
        %v1603 = vmul.f32 %v1424, 1.442695
        %v1604 = vpow.pop %v1603
        %v1605 = vmul.f32 %v1425, 1.442695
        %v1606 = vpow.pop %v1605
        %v1607 = vmul.f32 %v1426, 1.442695
        %v1608 = vpow.pop %v1607
        %v1609 = vmul.f32 %v1427, 1.442695
        %v1610 = vpow.pop %v1609
        %v1611 = vmul.f32 %v1428, 1.442695
        %v1612 = vpow.pop %v1611
        %v1613 = vmul.f32 %v1429, 1.442695
        %v1614 = vpow.pop %v1613
        %v1615 = vmul.f32 %v1430, 1.442695
        %v1616 = vpow.pop %v1615
        %v1617 = vmul.f32 %v1431, 1.442695
        %v1618 = vpow.pop %v1617
        %v1619 = vmul.f32 %v1432, 1.442695
        %v1620 = vpow.pop %v1619
        %v1621 = vmul.f32 %v1433, 1.442695
        %v1622 = vpow.pop %v1621
        %v1623 = vmul.f32 %v1434, 1.442695
        %v1624 = vpow.pop %v1623
        %v1625 = vmul.f32 %v1435, 1.442695
        %v1626 = vpow.pop %v1625
        %v1627 = vmul.f32 %v1436, 1.442695
        %v1628 = vpow.pop %v1627
        %v1629 = vmul.f32 %v1437, 1.442695
        %v1630 = vpow.pop %v1629
        %v1631 = vmul.f32 %v1438, 1.442695
        %v1632 = vpow.pop %v1631
        %v1633 = vmul.f32 %v1439, 1.442695
        %v1634 = vpow.pop %v1633
        %v1635 = vmul.f32 %v1440, 1.442695
        %v1636 = vpow.pop %v1635
        %v1637 = vmul.f32 %v1441, 1.442695
        %v1638 = vpow.pop %v1637
        %v1639 = vmul.f32 %v1442, 1.442695
        %v1640 = vpow.pop %v1639
        %v1641 = vmul.f32 %v1443, 1.442695
        %v1642 = vpow.pop %v1641
        %v1643 = vmul.f32 %v1444, 1.442695
        %v1644 = vpow.pop %v1643
        %v1645 = vmul.f32 %v1445, 1.442695
        %v1646 = vpow.pop %v1645
        %v1647 = vmul.f32 %v1446, 1.442695
        %v1648 = vpow.pop %v1647
        %v1649 = vmul.f32 %v1447, 1.442695
        %v1650 = vpow.pop %v1649
        %v1651 = vmul.f32 %v1448, 1.442695
        %v1652 = vpow.pop %v1651
        %v1653 = vmul.f32 %v1449, 1.442695
        %v1654 = vpow.pop %v1653
        %v1655 = vmul.f32 %v1450, 1.442695
        %v1656 = vpow.pop %v1655
        %v1657 = vmul.f32 %v1451, 1.442695
        %v1658 = vpow.pop %v1657
        %v1659 = vmul.f32 %v1452, 1.442695
        %v1660 = vpow.pop %v1659
        %v1661 = vmul.f32 %v1453, 1.442695
        %v1662 = vpow.pop %v1661
        %v1663 = vmul.f32 %v1454, 1.442695
        %v1664 = vpow.pop %v1663
        %v1665 = vmul.f32 %v1455, 1.442695
        %v1666 = vpow.pop %v1665
        %v1667 = vmul.f32 %v1456, 1.442695
        %v1668 = vpow.pop %v1667
        %v1669 = vmul.f32 %v1457, 1.442695
        %v1670 = vpow.pop %v1669
        %v1671 = vmul.f32 %v1458, 1.442695
        %v1672 = vpow.pop %v1671
        %v1673 = vmul.f32 %v1459, 1.442695
        %v1674 = vpow.pop %v1673
        %v1675 = vmul.f32 %v1460, 1.442695
        %v1676 = vpow.pop %v1675
        %v1677 = vmul.f32 %v1461, 1.442695
        %v1678 = vpow.pop %v1677
        %v1679 = vmul.f32 %v1462, 1.442695
        %v1680 = vpow.pop %v1679
        %v1681 = vmul.f32 %v1463, 1.442695
        %v1682 = vpow.pop %v1681
        %v1683 = vmul.f32 %v1464, 1.442695
        %v1684 = vpow.pop %v1683
        %v1685 = vmul.f32 %v1465, 1.442695
        %v1686 = vpow.pop %v1685
        %v1687 = vmul.f32 %v1466, 1.442695
        %v1688 = vpow.pop %v1687
        %v1689 = vmul.f32 %v1467, 1.442695
        %v1690 = vpow.pop %v1689
        %v1691 = vmul.f32 %v1468, 1.442695
        %v1692 = vpow.pop %v1691
        %v1693 = vmul.f32 %v1469, 1.442695
        %v1694 = vpow.pop %v1693
        %v1695 = vmul.f32 %v1470, 1.442695
        %v1696 = vpow.pop %v1695
        %v1697 = vmul.f32 %v1471, 1.442695
        %v1698 = vpow.pop %v1697
        %v1699 = vmul.f32 %v1472, 1.442695
        %v1700 = vpow.pop %v1699
        %v1701 = vmul.f32 %v1473, 1.442695
        %v1702 = vpow.pop %v1701
        %v1703 = vmul.f32 %v1474, 1.442695
        %v1704 = vpow.pop %v1703
        %v1705 = vmul.f32 %v1475, 1.442695
        %v1706 = vpow.pop %v1705
        %v1707 = vmul.f32 %v1476, 1.442695
        %v1708 = vpow.pop %v1707
        %v1709 = vmul.f32 %v1477, 1.442695
        %v1710 = vpow.pop %v1709
        %v1711 = vmul.f32 %v1478, 1.442695
        %v1712 = vpow.pop %v1711
        %v1713 = vmul.f32 %v1479, 1.442695
        %v1714 = vpow.pop %v1713
        %v1715 = vmul.f32 %v1480, 1.442695
        %v1716 = vpow.pop %v1715
        %v1717 = vmul.f32 %v1481, 1.442695
        %v1718 = vpow.pop %v1717
        %v1719 = vmul.f32 %v1482, 1.442695
        %v1720 = vpow.pop %v1719
        %v1721 = vmul.f32 %v1483, 1.442695
        %v1722 = vpow.pop %v1721
        %v1723 = vmul.f32 %v1484, 1.442695
        %v1724 = vpow.pop %v1723
        %v1725 = vmul.f32 %v1485, 1.442695
        %v1726 = vpow.pop %v1725
        %v1727 = vmul.f32 %v1486, 1.442695
        %v1728 = vpow.pop %v1727
        %v1729 = vmul.f32 %v1487, 1.442695
        %v1730 = vpow.pop %v1729
        %v1731 = vmul.f32 %v1488, 1.442695
        %v1732 = vpow.pop %v1731
        %v1733 = vmul.f32 %v1489, 1.442695
        %v1734 = vpow.pop %v1733
        %v1735 = vmul.f32 %v1490, 1.442695
        %v1736 = vpow.pop %v1735
        %v1737 = vmul.f32 %v1491, 1.442695
        %v1738 = vpow.pop %v1737
        %v1739 = vmul.f32 %v1492, 1.442695
        %v1740 = vpow.pop %v1739
        %v1741 = vmul.f32 %v1493, 1.442695
        %v1742 = vpow.pop %v1741
        %v1743 = vmul.f32 %v1494, 1.442695
        %v1744 = vpow.pop %v1743
        %v1745 = vmul.f32 %v1495, 1.442695
        %v1746 = vpow.pop %v1745
        %v1747 = vmul.f32 %v1496, 1.442695
        %v1748 = vpow.pop %v1747
        %v1749 = vmul.f32 %v1497, 1.442695
        %v1750 = vpow.pop %v1749
        %v1751 = vmul.f32 %v1498, 1.442695
        %v1752 = vpow.pop %v1751
        %v1753 = vmul.f32 %v1499, 1.442695
        %v1754 = vpow.pop %v1753
        %v1755 = vmul.f32 %v1500, 1.442695
        %v1756 = vpow.pop %v1755
        %v1757 = vadd.f32 %v1502, 1.0
        %v1758 = vadd.f32 %v1504, 1.0
        %v1759 = vadd.f32 %v1506, 1.0
        %v1760 = vadd.f32 %v1508, 1.0
        %v1761 = vadd.f32 %v1510, 1.0
        %v1762 = vadd.f32 %v1512, 1.0
        %v1763 = vadd.f32 %v1514, 1.0
        %v1764 = vadd.f32 %v1516, 1.0
        %v1765 = vadd.f32 %v1518, 1.0
        %v1766 = vadd.f32 %v1520, 1.0
        %v1767 = vadd.f32 %v1522, 1.0
        %v1768 = vadd.f32 %v1524, 1.0
        %v1769 = vadd.f32 %v1526, 1.0
        %v1770 = vadd.f32 %v1528, 1.0
        %v1771 = vadd.f32 %v1530, 1.0
        %v1772 = vadd.f32 %v1532, 1.0
        %v1773 = vadd.f32 %v1534, 1.0
        %v1774 = vadd.f32 %v1536, 1.0
        %v1775 = vadd.f32 %v1538, 1.0
        %v1776 = vadd.f32 %v1540, 1.0
        %v1777 = vadd.f32 %v1542, 1.0
        %v1778 = vadd.f32 %v1544, 1.0
        %v1779 = vadd.f32 %v1546, 1.0
        %v1780 = vadd.f32 %v1548, 1.0
        %v1781 = vadd.f32 %v1550, 1.0
        %v1782 = vadd.f32 %v1552, 1.0
        %v1783 = vadd.f32 %v1554, 1.0
        %v1784 = vadd.f32 %v1556, 1.0
        %v1785 = vadd.f32 %v1558, 1.0
        %v1786 = vadd.f32 %v1560, 1.0
        %v1787 = vadd.f32 %v1562, 1.0
        %v1788 = vadd.f32 %v1564, 1.0
        %v1789 = vadd.f32 %v1566, 1.0
        %v1790 = vadd.f32 %v1568, 1.0
        %v1791 = vadd.f32 %v1570, 1.0
        %v1792 = vadd.f32 %v1572, 1.0
        %v1793 = vadd.f32 %v1574, 1.0
        %v1794 = vadd.f32 %v1576, 1.0
        %v1795 = vadd.f32 %v1578, 1.0
        %v1796 = vadd.f32 %v1580, 1.0
        %v1797 = vadd.f32 %v1582, 1.0
        %v1798 = vadd.f32 %v1584, 1.0
        %v1799 = vadd.f32 %v1586, 1.0
        %v1800 = vadd.f32 %v1588, 1.0
        %v1801 = vadd.f32 %v1590, 1.0
        %v1802 = vadd.f32 %v1592, 1.0
        %v1803 = vadd.f32 %v1594, 1.0
        %v1804 = vadd.f32 %v1596, 1.0
        %v1805 = vadd.f32 %v1598, 1.0
        %v1806 = vadd.f32 %v1600, 1.0
        %v1807 = vadd.f32 %v1602, 1.0
        %v1808 = vadd.f32 %v1604, 1.0
        %v1809 = vadd.f32 %v1606, 1.0
        %v1810 = vadd.f32 %v1608, 1.0
        %v1811 = vadd.f32 %v1610, 1.0
        %v1812 = vadd.f32 %v1612, 1.0
        %v1813 = vadd.f32 %v1614, 1.0
        %v1814 = vadd.f32 %v1616, 1.0
        %v1815 = vadd.f32 %v1618, 1.0
        %v1816 = vadd.f32 %v1620, 1.0
        %v1817 = vadd.f32 %v1622, 1.0
        %v1818 = vadd.f32 %v1624, 1.0
        %v1819 = vadd.f32 %v1626, 1.0
        %v1820 = vadd.f32 %v1628, 1.0
        %v1821 = vadd.f32 %v1630, 1.0
        %v1822 = vadd.f32 %v1632, 1.0
        %v1823 = vadd.f32 %v1634, 1.0
        %v1824 = vadd.f32 %v1636, 1.0
        %v1825 = vadd.f32 %v1638, 1.0
        %v1826 = vadd.f32 %v1640, 1.0
        %v1827 = vadd.f32 %v1642, 1.0
        %v1828 = vadd.f32 %v1644, 1.0
        %v1829 = vadd.f32 %v1646, 1.0
        %v1830 = vadd.f32 %v1648, 1.0
        %v1831 = vadd.f32 %v1650, 1.0
        %v1832 = vadd.f32 %v1652, 1.0
        %v1833 = vadd.f32 %v1654, 1.0
        %v1834 = vadd.f32 %v1656, 1.0
        %v1835 = vadd.f32 %v1658, 1.0
        %v1836 = vadd.f32 %v1660, 1.0
        %v1837 = vadd.f32 %v1662, 1.0
        %v1838 = vadd.f32 %v1664, 1.0
        %v1839 = vadd.f32 %v1666, 1.0
        %v1840 = vadd.f32 %v1668, 1.0
        %v1841 = vadd.f32 %v1670, 1.0
        %v1842 = vadd.f32 %v1672, 1.0
        %v1843 = vadd.f32 %v1674, 1.0
        %v1844 = vadd.f32 %v1676, 1.0
        %v1845 = vadd.f32 %v1678, 1.0
        %v1846 = vadd.f32 %v1680, 1.0
        %v1847 = vadd.f32 %v1682, 1.0
        %v1848 = vadd.f32 %v1684, 1.0
        %v1849 = vadd.f32 %v1686, 1.0
        %v1850 = vadd.f32 %v1688, 1.0
        %v1851 = vadd.f32 %v1690, 1.0
        %v1852 = vadd.f32 %v1692, 1.0
        %v1853 = vadd.f32 %v1694, 1.0
        %v1854 = vadd.f32 %v1696, 1.0
        %v1855 = vadd.f32 %v1698, 1.0
        %v1856 = vadd.f32 %v1700, 1.0
        %v1857 = vadd.f32 %v1702, 1.0
        %v1858 = vadd.f32 %v1704, 1.0
        %v1859 = vadd.f32 %v1706, 1.0
        %v1860 = vadd.f32 %v1708, 1.0
        %v1861 = vadd.f32 %v1710, 1.0
        %v1862 = vadd.f32 %v1712, 1.0
        %v1863 = vadd.f32 %v1714, 1.0
        %v1864 = vadd.f32 %v1716, 1.0
        %v1865 = vadd.f32 %v1718, 1.0
        %v1866 = vadd.f32 %v1720, 1.0
        %v1867 = vadd.f32 %v1722, 1.0
        %v1868 = vadd.f32 %v1724, 1.0
        %v1869 = vadd.f32 %v1726, 1.0
        %v1870 = vadd.f32 %v1728, 1.0
        %v1871 = vadd.f32 %v1730, 1.0
        %v1872 = vadd.f32 %v1732, 1.0
        %v1873 = vadd.f32 %v1734, 1.0
        %v1874 = vadd.f32 %v1736, 1.0
        %v1875 = vadd.f32 %v1738, 1.0
        %v1876 = vadd.f32 %v1740, 1.0
        %v1877 = vadd.f32 %v1742, 1.0
        %v1878 = vadd.f32 %v1744, 1.0
        %v1879 = vadd.f32 %v1746, 1.0
        %v1880 = vadd.f32 %v1748, 1.0
        %v1881 = vadd.f32 %v1750, 1.0
        %v1882 = vadd.f32 %v1752, 1.0
        %v1883 = vadd.f32 %v1754, 1.0
        %v1884 = vadd.f32 %v1756, 1.0
        %v1885 = vrcp.pop %v1757
        %v1886 = vmul.f32 1.0, %v1885
        %v1887 = vrcp.pop %v1758
        %v1888 = vmul.f32 1.0, %v1887
        %v1889 = vrcp.pop %v1759
        %v1890 = vmul.f32 1.0, %v1889
        %v1891 = vrcp.pop %v1760
        %v1892 = vmul.f32 1.0, %v1891
        %v1893 = vrcp.pop %v1761
        %v1894 = vmul.f32 1.0, %v1893
        %v1895 = vrcp.pop %v1762
        %v1896 = vmul.f32 1.0, %v1895
        %v1897 = vrcp.pop %v1763
        %v1898 = vmul.f32 1.0, %v1897
        %v1899 = vrcp.pop %v1764
        %v1900 = vmul.f32 1.0, %v1899
        %v1901 = vrcp.pop %v1765
        %v1902 = vmul.f32 1.0, %v1901
        %v1903 = vrcp.pop %v1766
        %v1904 = vmul.f32 1.0, %v1903
        %v1905 = vrcp.pop %v1767
        %v1906 = vmul.f32 1.0, %v1905
        %v1907 = vrcp.pop %v1768
        %v1908 = vmul.f32 1.0, %v1907
        %v1909 = vrcp.pop %v1769
        %v1910 = vmul.f32 1.0, %v1909
        %v1911 = vrcp.pop %v1770
        %v1912 = vmul.f32 1.0, %v1911
        %v1913 = vrcp.pop %v1771
        %v1914 = vmul.f32 1.0, %v1913
        %v1915 = vrcp.pop %v1772
        %v1916 = vmul.f32 1.0, %v1915
        %v1917 = vrcp.pop %v1773
        %v1918 = vmul.f32 1.0, %v1917
        %v1919 = vrcp.pop %v1774
        %v1920 = vmul.f32 1.0, %v1919
        %v1921 = vrcp.pop %v1775
        %v1922 = vmul.f32 1.0, %v1921
        %v1923 = vrcp.pop %v1776
        %v1924 = vmul.f32 1.0, %v1923
        %v1925 = vrcp.pop %v1777
        %v1926 = vmul.f32 1.0, %v1925
        %v1927 = vrcp.pop %v1778
        %v1928 = vmul.f32 1.0, %v1927
        %v1929 = vrcp.pop %v1779
        %v1930 = vmul.f32 1.0, %v1929
        %v1931 = vrcp.pop %v1780
        %v1932 = vmul.f32 1.0, %v1931
        %v1933 = vrcp.pop %v1781
        %v1934 = vmul.f32 1.0, %v1933
        %v1935 = vrcp.pop %v1782
        %v1936 = vmul.f32 1.0, %v1935
        %v1937 = vrcp.pop %v1783
        %v1938 = vmul.f32 1.0, %v1937
        %v1939 = vrcp.pop %v1784
        %v1940 = vmul.f32 1.0, %v1939
        %v1941 = vrcp.pop %v1785
        %v1942 = vmul.f32 1.0, %v1941
        %v1943 = vrcp.pop %v1786
        %v1944 = vmul.f32 1.0, %v1943
        %v1945 = vrcp.pop %v1787
        %v1946 = vmul.f32 1.0, %v1945
        %v1947 = vrcp.pop %v1788
        %v1948 = vmul.f32 1.0, %v1947
        %v1949 = vrcp.pop %v1789
        %v1950 = vmul.f32 1.0, %v1949
        %v1951 = vrcp.pop %v1790
        %v1952 = vmul.f32 1.0, %v1951
        %v1953 = vrcp.pop %v1791
        %v1954 = vmul.f32 1.0, %v1953
        %v1955 = vrcp.pop %v1792
        %v1956 = vmul.f32 1.0, %v1955
        %v1957 = vrcp.pop %v1793
        %v1958 = vmul.f32 1.0, %v1957
        %v1959 = vrcp.pop %v1794
        %v1960 = vmul.f32 1.0, %v1959
        %v1961 = vrcp.pop %v1795
        %v1962 = vmul.f32 1.0, %v1961
        %v1963 = vrcp.pop %v1796
        %v1964 = vmul.f32 1.0, %v1963
        %v1965 = vrcp.pop %v1797
        %v1966 = vmul.f32 1.0, %v1965
        %v1967 = vrcp.pop %v1798
        %v1968 = vmul.f32 1.0, %v1967
        %v1969 = vrcp.pop %v1799
        %v1970 = vmul.f32 1.0, %v1969
        %v1971 = vrcp.pop %v1800
        %v1972 = vmul.f32 1.0, %v1971
        %v1973 = vrcp.pop %v1801
        %v1974 = vmul.f32 1.0, %v1973
        %v1975 = vrcp.pop %v1802
        %v1976 = vmul.f32 1.0, %v1975
        %v1977 = vrcp.pop %v1803
        %v1978 = vmul.f32 1.0, %v1977
        %v1979 = vrcp.pop %v1804
        %v1980 = vmul.f32 1.0, %v1979
        %v1981 = vrcp.pop %v1805
        %v1982 = vmul.f32 1.0, %v1981
        %v1983 = vrcp.pop %v1806
        %v1984 = vmul.f32 1.0, %v1983
        %v1985 = vrcp.pop %v1807
        %v1986 = vmul.f32 1.0, %v1985
        %v1987 = vrcp.pop %v1808
        %v1988 = vmul.f32 1.0, %v1987
        %v1989 = vrcp.pop %v1809
        %v1990 = vmul.f32 1.0, %v1989
        %v1991 = vrcp.pop %v1810
        %v1992 = vmul.f32 1.0, %v1991
        %v1993 = vrcp.pop %v1811
        %v1994 = vmul.f32 1.0, %v1993
        %v1995 = vrcp.pop %v1812
        %v1996 = vmul.f32 1.0, %v1995
        %v1997 = vrcp.pop %v1813
        %v1998 = vmul.f32 1.0, %v1997
        %v1999 = vrcp.pop %v1814
        %v2000 = vmul.f32 1.0, %v1999
        %v2001 = vrcp.pop %v1815
        %v2002 = vmul.f32 1.0, %v2001
        %v2003 = vrcp.pop %v1816
        %v2004 = vmul.f32 1.0, %v2003
        %v2005 = vrcp.pop %v1817
        %v2006 = vmul.f32 1.0, %v2005
        %v2007 = vrcp.pop %v1818
        %v2008 = vmul.f32 1.0, %v2007
        %v2009 = vrcp.pop %v1819
        %v2010 = vmul.f32 1.0, %v2009
        %v2011 = vrcp.pop %v1820
        %v2012 = vmul.f32 1.0, %v2011
        %v2013 = vrcp.pop %v1821
        %v2014 = vmul.f32 1.0, %v2013
        %v2015 = vrcp.pop %v1822
        %v2016 = vmul.f32 1.0, %v2015
        %v2017 = vrcp.pop %v1823
        %v2018 = vmul.f32 1.0, %v2017
        %v2019 = vrcp.pop %v1824
        %v2020 = vmul.f32 1.0, %v2019
        %v2021 = vrcp.pop %v1825
        %v2022 = vmul.f32 1.0, %v2021
        %v2023 = vrcp.pop %v1826
        %v2024 = vmul.f32 1.0, %v2023
        %v2025 = vrcp.pop %v1827
        %v2026 = vmul.f32 1.0, %v2025
        %v2027 = vrcp.pop %v1828
        %v2028 = vmul.f32 1.0, %v2027
        %v2029 = vrcp.pop %v1829
        %v2030 = vmul.f32 1.0, %v2029
        %v2031 = vrcp.pop %v1830
        %v2032 = vmul.f32 1.0, %v2031
        %v2033 = vrcp.pop %v1831
        %v2034 = vmul.f32 1.0, %v2033
        %v2035 = vrcp.pop %v1832
        %v2036 = vmul.f32 1.0, %v2035
        %v2037 = vrcp.pop %v1833
        %v2038 = vmul.f32 1.0, %v2037
        %v2039 = vrcp.pop %v1834
        %v2040 = vmul.f32 1.0, %v2039
        %v2041 = vrcp.pop %v1835
        %v2042 = vmul.f32 1.0, %v2041
        %v2043 = vrcp.pop %v1836
        %v2044 = vmul.f32 1.0, %v2043
        %v2045 = vrcp.pop %v1837
        %v2046 = vmul.f32 1.0, %v2045
        %v2047 = vrcp.pop %v1838
        %v2048 = vmul.f32 1.0, %v2047
        %v2049 = vrcp.pop %v1839
        %v2050 = vmul.f32 1.0, %v2049
        %v2051 = vrcp.pop %v1840
        %v2052 = vmul.f32 1.0, %v2051
        %v2053 = vrcp.pop %v1841
        %v2054 = vmul.f32 1.0, %v2053
        %v2055 = vrcp.pop %v1842
        %v2056 = vmul.f32 1.0, %v2055
        %v2057 = vrcp.pop %v1843
        %v2058 = vmul.f32 1.0, %v2057
        %v2059 = vrcp.pop %v1844
        %v2060 = vmul.f32 1.0, %v2059
        %v2061 = vrcp.pop %v1845
        %v2062 = vmul.f32 1.0, %v2061
        %v2063 = vrcp.pop %v1846
        %v2064 = vmul.f32 1.0, %v2063
        %v2065 = vrcp.pop %v1847
        %v2066 = vmul.f32 1.0, %v2065
        %v2067 = vrcp.pop %v1848
        %v2068 = vmul.f32 1.0, %v2067
        %v2069 = vrcp.pop %v1849
        %v2070 = vmul.f32 1.0, %v2069
        %v2071 = vrcp.pop %v1850
        %v2072 = vmul.f32 1.0, %v2071
        %v2073 = vrcp.pop %v1851
        %v2074 = vmul.f32 1.0, %v2073
        %v2075 = vrcp.pop %v1852
        %v2076 = vmul.f32 1.0, %v2075
        %v2077 = vrcp.pop %v1853
        %v2078 = vmul.f32 1.0, %v2077
        %v2079 = vrcp.pop %v1854
        %v2080 = vmul.f32 1.0, %v2079
        %v2081 = vrcp.pop %v1855
        %v2082 = vmul.f32 1.0, %v2081
        %v2083 = vrcp.pop %v1856
        %v2084 = vmul.f32 1.0, %v2083
        %v2085 = vrcp.pop %v1857
        %v2086 = vmul.f32 1.0, %v2085
        %v2087 = vrcp.pop %v1858
        %v2088 = vmul.f32 1.0, %v2087
        %v2089 = vrcp.pop %v1859
        %v2090 = vmul.f32 1.0, %v2089
        %v2091 = vrcp.pop %v1860
        %v2092 = vmul.f32 1.0, %v2091
        %v2093 = vrcp.pop %v1861
        %v2094 = vmul.f32 1.0, %v2093
        %v2095 = vrcp.pop %v1862
        %v2096 = vmul.f32 1.0, %v2095
        %v2097 = vrcp.pop %v1863
        %v2098 = vmul.f32 1.0, %v2097
        %v2099 = vrcp.pop %v1864
        %v2100 = vmul.f32 1.0, %v2099
        %v2101 = vrcp.pop %v1865
        %v2102 = vmul.f32 1.0, %v2101
        %v2103 = vrcp.pop %v1866
        %v2104 = vmul.f32 1.0, %v2103
        %v2105 = vrcp.pop %v1867
        %v2106 = vmul.f32 1.0, %v2105
        %v2107 = vrcp.pop %v1868
        %v2108 = vmul.f32 1.0, %v2107
        %v2109 = vrcp.pop %v1869
        %v2110 = vmul.f32 1.0, %v2109
        %v2111 = vrcp.pop %v1870
        %v2112 = vmul.f32 1.0, %v2111
        %v2113 = vrcp.pop %v1871
        %v2114 = vmul.f32 1.0, %v2113
        %v2115 = vrcp.pop %v1872
        %v2116 = vmul.f32 1.0, %v2115
        %v2117 = vrcp.pop %v1873
        %v2118 = vmul.f32 1.0, %v2117
        %v2119 = vrcp.pop %v1874
        %v2120 = vmul.f32 1.0, %v2119
        %v2121 = vrcp.pop %v1875
        %v2122 = vmul.f32 1.0, %v2121
        %v2123 = vrcp.pop %v1876
        %v2124 = vmul.f32 1.0, %v2123
        %v2125 = vrcp.pop %v1877
        %v2126 = vmul.f32 1.0, %v2125
        %v2127 = vrcp.pop %v1878
        %v2128 = vmul.f32 1.0, %v2127
        %v2129 = vrcp.pop %v1879
        %v2130 = vmul.f32 1.0, %v2129
        %v2131 = vrcp.pop %v1880
        %v2132 = vmul.f32 1.0, %v2131
        %v2133 = vrcp.pop %v1881
        %v2134 = vmul.f32 1.0, %v2133
        %v2135 = vrcp.pop %v1882
        %v2136 = vmul.f32 1.0, %v2135
        %v2137 = vrcp.pop %v1883
        %v2138 = vmul.f32 1.0, %v2137
        %v2139 = vrcp.pop %v1884
        %v2140 = vmul.f32 1.0, %v2139
        %2141 = vst [vmem:[%s276] sm:$0xff] %v1886
        %2142 = vst [vmem:[%s276 + $0x8] sm:$0xff] %v1888
        %2143 = vst [vmem:[%s276 + $0x10] sm:$0xff] %v1890
        %2144 = vst [vmem:[%s276 + $0x18] sm:$0xff] %v1892
        %2145 = vst [vmem:[%s276 + $0x20] sm:$0xff] %v1894
        %2146 = vst [vmem:[%s276 + $0x28] sm:$0xff] %v1896
        %2147 = vst [vmem:[%s276 + $0x30] sm:$0xff] %v1898
        %2148 = vst [vmem:[%s276 + $0x38] sm:$0xff] %v1900
        %2149 = vst [vmem:[%s276 + $0x40] sm:$0xff] %v1902
        %2150 = vst [vmem:[%s276 + $0x48] sm:$0xff] %v1904
        %2151 = vst [vmem:[%s276 + $0x50] sm:$0xff] %v1906
        %2152 = vst [vmem:[%s276 + $0x58] sm:$0xff] %v1908
        %2153 = vst [vmem:[%s276 + $0x60] sm:$0xff] %v1910
        %2154 = vst [vmem:[%s276 + $0x68] sm:$0xff] %v1912
        %2155 = vst [vmem:[%s276 + $0x70] sm:$0xff] %v1914
        %2156 = vst [vmem:[%s276 + $0x78] sm:$0xff] %v1916
        %2157 = vst [vmem:[%s276 + $0x80] sm:$0xff] %v1918
        %2158 = vst [vmem:[%s276 + $0x88] sm:$0xff] %v1920
        %2159 = vst [vmem:[%s276 + $0x90] sm:$0xff] %v1922
        %2160 = vst [vmem:[%s276 + $0x98] sm:$0xff] %v1924
        %2161 = vst [vmem:[%s276 + $0xa0] sm:$0xff] %v1926
        %2162 = vst [vmem:[%s276 + $0xa8] sm:$0xff] %v1928
        %2163 = vst [vmem:[%s276 + $0xb0] sm:$0xff] %v1930
        %2164 = vst [vmem:[%s276 + $0xb8] sm:$0xff] %v1932
        %2165 = vst [vmem:[%s276 + $0xc0] sm:$0xff] %v1934
        %2166 = vst [vmem:[%s276 + $0xc8] sm:$0xff] %v1936
        %2167 = vst [vmem:[%s276 + $0xd0] sm:$0xff] %v1938
        %2168 = vst [vmem:[%s276 + $0xd8] sm:$0xff] %v1940
        %2169 = vst [vmem:[%s276 + $0xe0] sm:$0xff] %v1942
        %2170 = vst [vmem:[%s276 + $0xe8] sm:$0xff] %v1944
        %2171 = vst [vmem:[%s276 + $0xf0] sm:$0xff] %v1946
        %2172 = vst [vmem:[%s276 + $0xf8] sm:$0xff] %v1948
        %2173 = vst [vmem:[%s276 + $0x100] sm:$0xff] %v1950
        %2174 = vst [vmem:[%s276 + $0x108] sm:$0xff] %v1952
        %2175 = vst [vmem:[%s276 + $0x110] sm:$0xff] %v1954
        %2176 = vst [vmem:[%s276 + $0x118] sm:$0xff] %v1956
        %2177 = vst [vmem:[%s276 + $0x120] sm:$0xff] %v1958
        %2178 = vst [vmem:[%s276 + $0x128] sm:$0xff] %v1960
        %2179 = vst [vmem:[%s276 + $0x130] sm:$0xff] %v1962
        %2180 = vst [vmem:[%s276 + $0x138] sm:$0xff] %v1964
        %2181 = vst [vmem:[%s276 + $0x140] sm:$0xff] %v1966
        %2182 = vst [vmem:[%s276 + $0x148] sm:$0xff] %v1968
        %2183 = vst [vmem:[%s276 + $0x150] sm:$0xff] %v1970
        %2184 = vst [vmem:[%s276 + $0x158] sm:$0xff] %v1972
        %2185 = vst [vmem:[%s276 + $0x160] sm:$0xff] %v1974
        %2186 = vst [vmem:[%s276 + $0x168] sm:$0xff] %v1976
        %2187 = vst [vmem:[%s276 + $0x170] sm:$0xff] %v1978
        %2188 = vst [vmem:[%s276 + $0x178] sm:$0xff] %v1980
        %2189 = vst [vmem:[%s276 + $0x180] sm:$0xff] %v1982
        %2190 = vst [vmem:[%s276 + $0x188] sm:$0xff] %v1984
        %2191 = vst [vmem:[%s276 + $0x190] sm:$0xff] %v1986
        %2192 = vst [vmem:[%s276 + $0x198] sm:$0xff] %v1988
        %2193 = vst [vmem:[%s276 + $0x1a0] sm:$0xff] %v1990
        %2194 = vst [vmem:[%s276 + $0x1a8] sm:$0xff] %v1992
        %2195 = vst [vmem:[%s276 + $0x1b0] sm:$0xff] %v1994
        %2196 = vst [vmem:[%s276 + $0x1b8] sm:$0xff] %v1996
        %2197 = vst [vmem:[%s276 + $0x1c0] sm:$0xff] %v1998
        %2198 = vst [vmem:[%s276 + $0x1c8] sm:$0xff] %v2000
        %2199 = vst [vmem:[%s276 + $0x1d0] sm:$0xff] %v2002
        %2200 = vst [vmem:[%s276 + $0x1d8] sm:$0xff] %v2004
        %2201 = vst [vmem:[%s276 + $0x1e0] sm:$0xff] %v2006
        %2202 = vst [vmem:[%s276 + $0x1e8] sm:$0xff] %v2008
        %2203 = vst [vmem:[%s276 + $0x1f0] sm:$0xff] %v2010
        %2204 = vst [vmem:[%s276 + $0x1f8] sm:$0xff] %v2012
        %2205 = vst [vmem:[%s276 + $0x200] sm:$0xff] %v2014
        %2206 = vst [vmem:[%s276 + $0x208] sm:$0xff] %v2016
        %2207 = vst [vmem:[%s276 + $0x210] sm:$0xff] %v2018
        %2208 = vst [vmem:[%s276 + $0x218] sm:$0xff] %v2020
        %2209 = vst [vmem:[%s276 + $0x220] sm:$0xff] %v2022
        %2210 = vst [vmem:[%s276 + $0x228] sm:$0xff] %v2024
        %2211 = vst [vmem:[%s276 + $0x230] sm:$0xff] %v2026
        %2212 = vst [vmem:[%s276 + $0x238] sm:$0xff] %v2028
        %2213 = vst [vmem:[%s276 + $0x240] sm:$0xff] %v2030
        %2214 = vst [vmem:[%s276 + $0x248] sm:$0xff] %v2032
        %2215 = vst [vmem:[%s276 + $0x250] sm:$0xff] %v2034
        %2216 = vst [vmem:[%s276 + $0x258] sm:$0xff] %v2036
        %2217 = vst [vmem:[%s276 + $0x260] sm:$0xff] %v2038
        %2218 = vst [vmem:[%s276 + $0x268] sm:$0xff] %v2040
        %2219 = vst [vmem:[%s276 + $0x270] sm:$0xff] %v2042
        %2220 = vst [vmem:[%s276 + $0x278] sm:$0xff] %v2044
        %2221 = vst [vmem:[%s276 + $0x280] sm:$0xff] %v2046
        %2222 = vst [vmem:[%s276 + $0x288] sm:$0xff] %v2048
        %2223 = vst [vmem:[%s276 + $0x290] sm:$0xff] %v2050
        %2224 = vst [vmem:[%s276 + $0x298] sm:$0xff] %v2052
        %2225 = vst [vmem:[%s276 + $0x2a0] sm:$0xff] %v2054
        %2226 = vst [vmem:[%s276 + $0x2a8] sm:$0xff] %v2056
        %2227 = vst [vmem:[%s276 + $0x2b0] sm:$0xff] %v2058
        %2228 = vst [vmem:[%s276 + $0x2b8] sm:$0xff] %v2060
        %2229 = vst [vmem:[%s276 + $0x2c0] sm:$0xff] %v2062
        %2230 = vst [vmem:[%s276 + $0x2c8] sm:$0xff] %v2064
        %2231 = vst [vmem:[%s276 + $0x2d0] sm:$0xff] %v2066
        %2232 = vst [vmem:[%s276 + $0x2d8] sm:$0xff] %v2068
        %2233 = vst [vmem:[%s276 + $0x2e0] sm:$0xff] %v2070
        %2234 = vst [vmem:[%s276 + $0x2e8] sm:$0xff] %v2072
        %2235 = vst [vmem:[%s276 + $0x2f0] sm:$0xff] %v2074
        %2236 = vst [vmem:[%s276 + $0x2f8] sm:$0xff] %v2076
        %2237 = vst [vmem:[%s276 + $0x300] sm:$0xff] %v2078
        %2238 = vst [vmem:[%s276 + $0x308] sm:$0xff] %v2080
        %2239 = vst [vmem:[%s276 + $0x310] sm:$0xff] %v2082
        %2240 = vst [vmem:[%s276 + $0x318] sm:$0xff] %v2084
        %2241 = vst [vmem:[%s276 + $0x320] sm:$0xff] %v2086
        %2242 = vst [vmem:[%s276 + $0x328] sm:$0xff] %v2088
        %2243 = vst [vmem:[%s276 + $0x330] sm:$0xff] %v2090
        %2244 = vst [vmem:[%s276 + $0x338] sm:$0xff] %v2092
        %2245 = vst [vmem:[%s276 + $0x340] sm:$0xff] %v2094
        %2246 = vst [vmem:[%s276 + $0x348] sm:$0xff] %v2096
        %2247 = vst [vmem:[%s276 + $0x350] sm:$0xff] %v2098
        %2248 = vst [vmem:[%s276 + $0x358] sm:$0xff] %v2100
        %2249 = vst [vmem:[%s276 + $0x360] sm:$0xff] %v2102
        %2250 = vst [vmem:[%s276 + $0x368] sm:$0xff] %v2104
        %2251 = vst [vmem:[%s276 + $0x370] sm:$0xff] %v2106
        %2252 = vst [vmem:[%s276 + $0x378] sm:$0xff] %v2108
        %2253 = vst [vmem:[%s276 + $0x380] sm:$0xff] %v2110
        %2254 = vst [vmem:[%s276 + $0x388] sm:$0xff] %v2112
        %2255 = vst [vmem:[%s276 + $0x390] sm:$0xff] %v2114
        %2256 = vst [vmem:[%s276 + $0x398] sm:$0xff] %v2116
        %2257 = vst [vmem:[%s276 + $0x3a0] sm:$0xff] %v2118
        %2258 = vst [vmem:[%s276 + $0x3a8] sm:$0xff] %v2120
        %2259 = vst [vmem:[%s276 + $0x3b0] sm:$0xff] %v2122
        %2260 = vst [vmem:[%s276 + $0x3b8] sm:$0xff] %v2124
        %2261 = vst [vmem:[%s276 + $0x3c0] sm:$0xff] %v2126
        %2262 = vst [vmem:[%s276 + $0x3c8] sm:$0xff] %v2128
        %2263 = vst [vmem:[%s276 + $0x3d0] sm:$0xff] %v2130
        %2264 = vst [vmem:[%s276 + $0x3d8] sm:$0xff] %v2132
        %2265 = vst [vmem:[%s276 + $0x3e0] sm:$0xff] %v2134
        %2266 = vst [vmem:[%s276 + $0x3e8] sm:$0xff] %v2136
        %2267 = vst [vmem:[%s276 + $0x3f0] sm:$0xff] %v2138
        %2268 = vst [vmem:[%s276 + $0x3f8] sm:$0xff] %v2140
        %s2269 = smul.u32 16, %s20
        %p2270 = scmp.lt.s32.totalorder %s2269, 31
        %s2271 = scalar_select %p2270, %s2269, 31
        %s2272 = smul.addr %s2271, 8
        %s2273 = smul.addr %s2272, 8
        %s2274 = scalar_lea.vmem %s5, %s2273
        // Predicated region
        $region53: #{pallas_decode.1} parent=39 // pred_check
          %p2275 = pneg %p148
        $region54: #{pallas_decode.1} parent=39 // pred_check_branch
          %2277 = sbr.rel (%p2275) target = $region56
        $region55: #{pallas_decode.1} parent=39 // pred_region
          %s2278 = smul.u32 16, %s20
        $region56: #{pallas_decode.1} parent=39 // pred_fallthru
          _
      $region40: #{pallas_decode.1} parent=5 // pred_fallthru
        _
      %p2279 = scmp.le.s32.totalorder 2, %s15
      // Predicated region
      $region57: #{pallas_decode.1} parent=5 // pred_check
        %p2280 = pneg %p2279
      $region58: #{pallas_decode.1} parent=5 // pred_check_branch
        %2282 = sbr.rel (%p2280) target = $region60
      $region59: #{pallas_decode.1} parent=5 // pred_region
        %s2283 = ssub.s32 %s15, 2
        // Predicated region
        $region61: #{pallas_decode.1} parent=59 // pred_check
          %p2284 = pneg %p154
        $region62: #{pallas_decode.1} parent=59 // pred_check_branch
          %2286 = sbr.rel (%p2284) target = $region64
        $region63: #{pallas_decode.1} parent=59 // pred_region
          %s2287 = smul.u32 16, %s21
          %p2288 = scmp.lt.s32.totalorder %s2287, 31
          %s2289 = scalar_select %p2288, %s2287, 31
          %s2290 = smul.addr %s2289, 8
          %s2291 = smul.addr %s2290, 8
          %s2292 = scalar_lea.vmem %s5, %s2291
        $region64: #{pallas_decode.1} parent=59 // pred_fallthru
          _
      $region60: #{pallas_decode.1} parent=5 // pred_fallthru
        _
    $region6: #{pallas_decode.1} parent=1 // loop_footer
      %s19 = sadd.s32 1, %s15
    $region7: #{pallas_decode.1} parent=1 // loop_footer_branch
      %14 = sbr.rel target = $region3
    $region8: #{pallas_decode.1} parent=1 // loop_exit
      _
    %2293 = vsyncpa [#allocation3], 1
    %s2294 = scalar_lea.sflag [#allocation3], 1
    %2295 = vsyncpa %s2294, 1
    %2296 = vsyncpa [#allocation5], 1

</llo_original>
